<compile_context>
chip_gen: v6e
topology: v6e:2x2x1
jax: 0.10.0
libtpu: 0.0.40
codegen_flags: <defaults>
</compile_context>

<pallas_src>
import functools

import jax
import jax.numpy as jnp
from jax.experimental import pallas as pl
from jax.experimental.pallas import tpu as pltpu

LN_EPS = 1e-5   # PyTorch nn.LayerNorm default
LANE = 128


def _round_up(n, m):
    return (n + m - 1) // m * m


# ----------------------------------------------------------------------------
# Kernel: fused DoubleQCritic forward (both heads, all layers)
# ----------------------------------------------------------------------------
def _double_q_kernel(n_mid, h0, x_ref, *refs):
    """refs layout (all VMEM, all 2D):
       w0_fused, b0_fused, gamma1, beta1, gamma2, beta2,
       (w_i_fused, b_i_fused) for each of the n_mid middle layers,
       w_out_fused, b_out_fused, out_ref
    """
    out_ref = refs[-1]
    prm = refs[:-1]
    w0_ref, b0_ref, g1_ref, bt1_ref, g2_ref, bt2_ref = prm[:6]
    rest = prm[6:]

    x = x_ref[...]  # fp32 (block_b, Din_pad)

    # Fused first Linear for both critics: (block_b, Din_pad) @ (Din_pad, 2*H0)
    h = jnp.dot(x, w0_ref[...], preferred_element_type=jnp.float32) + b0_ref[...]

    def layer_norm(v, g, b):
        mean = jnp.mean(v, axis=-1, keepdims=True)
        var = jnp.mean((v - mean) ** 2, axis=-1, keepdims=True)
        return (v - mean) * jax.lax.rsqrt(var + LN_EPS) * g + b

    # Per-head LayerNorm (over H0 real features each) + Tanh, then re-fuse lanes.
    h1 = jnp.tanh(layer_norm(h[:, :h0], g1_ref[...], bt1_ref[...]))
    h2 = jnp.tanh(layer_norm(h[:, h0:], g2_ref[...], bt2_ref[...]))
    h = jnp.concatenate([h1, h2], axis=-1)  # (block_b, 2*H0)

    # Block-diagonal fused middle layers with ReLU.
    for i in range(n_mid):
        w_ref, b_ref = rest[2 * i], rest[2 * i + 1]
        h = jnp.dot(h, w_ref[...], preferred_element_type=jnp.float32) + b_ref[...]
        h = jnp.maximum(h, 0.0)

    # Fused, lane-dense output layer: q1 -> lane 0, q2 -> lane 1, rest zero.
    w_out_ref, b_out_ref = rest[2 * n_mid], rest[2 * n_mid + 1]
    out = jnp.dot(h, w_out_ref[...], preferred_element_type=jnp.float32) + b_out_ref[...]
    out_ref[...] = out.astype(out_ref.dtype)


# ----------------------------------------------------------------------------
# Wrapper
# ----------------------------------------------------------------------------
def double_q_critic_pallas(obs, action, fused_params, num_hidden, h0, *, block_b=None):
    """obs: (B, obs_dim), action: (B, action_dim).  Returns (q1, q2), each (B, 1)."""
    x = jnp.concatenate([obs, action], axis=-1).astype(jnp.float32)
    B, d_in = x.shape
    d_in_pad = _round_up(d_in, LANE)
    if d_in_pad != d_in:
        x = jnp.pad(x, ((0, 0), (0, d_in_pad - d_in)))

    if block_b is None:
        # Collapse the grid to ~2 steps: big MXU M-tiles, and both TensorCores
        # get work on v7x (dimension_semantics=("parallel",)).
        if B >= 16 and (B // 2) % 8 == 0:
            block_b = B // 2
        else:
            block_b = B
    assert B % block_b == 0 and block_b % 8 == 0

    n_mid = num_hidden - 1
    kernel = functools.partial(_double_q_kernel, n_mid, h0)

    in_specs = [pl.BlockSpec((block_b, d_in_pad), lambda i: (i, 0))]
    for p in fused_params:
        # Small constant parameters: single full-extent VMEM block each.
        in_specs.append(pl.BlockSpec(p.shape, lambda i: (0, 0)))
    out_specs = pl.BlockSpec((block_b, LANE), lambda i: (i, 0))

    out = pl.pallas_call(
        kernel,
        out_shape=jax.ShapeDtypeStruct((B, LANE), jnp.float32),
        grid=(B // block_b,),
        in_specs=in_specs,
        out_specs=out_specs,
        compiler_params=pltpu.CompilerParams(dimension_semantics=("parallel",)),
    )(x, *fused_params)

    return out[:, 0:1], out[:, 1:2]


# ----------------------------------------------------------------------------
# Parameter construction (deterministic, PyTorch-style init) — plain JAX glue.
# TODO(synk): the original module applies an unspecified `weight_init`; we use
#             PyTorch's default nn.Linear init instead.
# ----------------------------------------------------------------------------
def _linear_init(key, in_dim, out_dim):
    kw, kb = jax.random.split(key)
    bound = 1.0 / jnp.sqrt(in_dim)
    w = jax.random.uniform(kw, (out_dim, in_dim), jnp.float32, -bound, bound)
    b = jax.random.uniform(kb, (out_dim,), jnp.float32, -bound, bound)
    return w, b


def _spectral_normalize(w, key, n_iter=1, eps=1e-12):
    """One power-iteration spectral norm (PyTorch spectral_norm default)."""
    u = jax.random.normal(key, (w.shape[0],), jnp.float32)
    u = u / (jnp.linalg.norm(u) + eps)
    v = None
    for _ in range(n_iter):
        v = w.T @ u
        v = v / (jnp.linalg.norm(v) + eps)
        u = w @ v
        u = u / (jnp.linalg.norm(u) + eps)
    sigma = u @ (w @ v)
    return w / sigma


def build_head_params(key, input_dim, output_dim, hidden_dims, spectral_norms):
    """One LayerNormMLP head: lists of (in,out) weights, (1,out) biases, LN affine."""
    assert len(hidden_dims) == len(spectral_norms)
    dims = [input_dim] + list(hidden_dims) + [output_dim]
    use_sn = list(spectral_norms) + [False]   # final Linear never has SN
    weights, biases = [], []
    for li in range(len(dims) - 1):
        key, k_init, k_sn = jax.random.split(key, 3)
        w, b = _linear_init(k_init, dims[li], dims[li + 1])
        if use_sn[li]:
            w = _spectral_normalize(w, k_sn)
        weights.append(jnp.asarray(w.T))            # (in, out) for x @ W
        biases.append(jnp.asarray(b).reshape(1, -1))
    gamma = jnp.ones((1, hidden_dims[0]), jnp.float32)
    beta = jnp.zeros((1, hidden_dims[0]), jnp.float32)
    return weights, biases, gamma, beta


def fuse_double_q_params(p1, p2, input_dim, hidden_dims):
    """Pack the two heads into one lane-dense fused parameter list."""
    w1s, b1s, g1, bt1 = p1
    w2s, b2s, g2, bt2 = p2
    h0 = hidden_dims[0]
    d_in_pad = _round_up(input_dim, LANE)

    def pad_rows(w, rows):
        return jnp.pad(w, ((0, rows - w.shape[0]), (0, 0)))

    # First layer: concat along output features, zero-pad input rows.
    w0 = jnp.concatenate([pad_rows(w1s[0], d_in_pad), pad_rows(w2s[0], d_in_pad)], axis=1)
    b0 = jnp.concatenate([b1s[0], b2s[0]], axis=1)
    fused = [w0, b0, g1, bt1, g2, bt2]

    # Per-head padded widths of each hidden stage (H0 stays real for LayerNorm).
    pads = [h0] + [_round_up(h, LANE) for h in hidden_dims[1:]]
    real = list(hidden_dims)

    # Middle layers: block-diagonal fused, zero-padded.
    for i in range(1, len(hidden_dims)):
        p_in, p_out = pads[i - 1], pads[i]
        r_in, r_out = real[i - 1], real[i]
        w = jnp.zeros((2 * p_in, 2 * p_out), jnp.float32)
        w = w.at[:r_in, :r_out].set(w1s[i])
        w = w.at[p_in:p_in + r_in, p_out:p_out + r_out].set(w2s[i])
        b = jnp.zeros((1, 2 * p_out), jnp.float32)
        b = b.at[:, :r_out].set(b1s[i])
        b = b.at[:, p_out:p_out + r_out].set(b2s[i])
        fused += [w, b]

    # Output layer: fused + padded to 128 lanes. q1 -> column 0, q2 -> column 1.
    p_last, r_last = pads[-1], real[-1]
    w_out = jnp.zeros((2 * p_last, LANE), jnp.float32)
    w_out = w_out.at[:r_last, 0:1].set(w1s[-1])
    w_out = w_out.at[p_last:p_last + r_last, 1:2].set(w2s[-1])
    b_out = jnp.zeros((1, LANE), jnp.float32)
    b_out = b_out.at[0, 0].set(b1s[-1][0, 0])
    b_out = b_out.at[0, 1].set(b2s[-1][0, 0])
    fused += [w_out, b_out]
    return fused


# ----------------------------------------------------------------------------
# Plain-JAX reference (one LayerNormMLP head), for correctness check only.
# ----------------------------------------------------------------------------
def layernorm_mlp_ref(x, weights, biases, gamma, beta):
    h = x @ weights[0] + biases[0]
    mean = jnp.mean(h, axis=-1, keepdims=True)
    var = jnp.mean((h - mean) ** 2, axis=-1, keepdims=True)
    h = (h - mean) / jnp.sqrt(var + LN_EPS) * gamma + beta
    h = jnp.tanh(h)
    for i in range(1, len(weights) - 1):
        h = jnp.maximum(h @ weights[i] + biases[i], 0.0)
    return h @ weights[-1] + biases[-1]


# ----------------------------------------------------------------------------
if __name__ == "__main__":
    key = jax.random.PRNGKey(0)

    # DoubleQCritic config (use_ln=True).  hidden_dims chosen lane-dense (128).
    obs_dim, action_dim = 17, 6
    hidden_dims = (128, 128)
    spectral_norms = (True, False)
    batch = 256

    k_obs, k_act, k_q1, k_q2 = jax.random.split(key, 4)
    obs = jax.random.normal(k_obs, (batch, obs_dim), jnp.float32)
    action = jax.random.normal(k_act, (batch, action_dim), jnp.float32)

    input_dim = obs_dim + action_dim
    p1 = build_head_params(k_q1, input_dim, 1, hidden_dims, spectral_norms)
    p2 = build_head_params(k_q2, input_dim, 1, hidden_dims, spectral_norms)
    fused_params = fuse_double_q_params(p1, p2, input_dim, hidden_dims)

    q1, q2 = double_q_critic_pallas(
        obs, action, fused_params, num_hidden=len(hidden_dims), h0=hidden_dims[0]
    )
    q1, q2 = jax.block_until_ready((q1, q2))

    # Reference check against the un-fused per-head forward.
    x = jnp.concatenate([obs, action], axis=-1)
    q1_ref = layernorm_mlp_ref(x, p1[0], p1[1], p1[2], p1[3])
    q2_ref = layernorm_mlp_ref(x, p2[0], p2[1], p2[2], p2[3])

    assert q1.shape == (batch, 1) and q2.shape == (batch, 1)
    assert jnp.allclose(q1, q1_ref, rtol=1e-4, atol=1e-5), "q1 mismatch vs reference"
    assert jnp.allclose(q2, q2_ref, rtol=1e-4, atol=1e-5), "q2 mismatch vs reference"

    print("KERNEL_OK")
</pallas_src>

<mosaic_0001>
module attributes {stable_mosaic.version = 11 : i64} {
  func.func @_double_q_kernel(%arg0: i32, %arg1: memref<128x128xf32, #tpu.memory_space<vmem>>, %arg2: memref<128x256xf32, #tpu.memory_space<vmem>>, %arg3: memref<1x256xf32, #tpu.memory_space<vmem>>, %arg4: memref<1x128xf32, #tpu.memory_space<vmem>>, %arg5: memref<1x128xf32, #tpu.memory_space<vmem>>, %arg6: memref<1x128xf32, #tpu.memory_space<vmem>>, %arg7: memref<1x128xf32, #tpu.memory_space<vmem>>, %arg8: memref<256x256xf32, #tpu.memory_space<vmem>>, %arg9: memref<1x256xf32, #tpu.memory_space<vmem>>, %arg10: memref<256x128xf32, #tpu.memory_space<vmem>>, %arg11: memref<1x128xf32, #tpu.memory_space<vmem>>, %arg12: memref<128x128xf32, #tpu.memory_space<vmem>>) attributes {dimension_semantics = [#tpu.dimension_semantics<parallel>], iteration_bounds = array<i64: 2>, scalar_prefetch = 0 : i64, scratch_operands = 0 : i64, tpu.core_type = #tpu.core_type<tc>, window_params = [{transform_indices = @transform_0, window_bounds = array<i64: 128, 128>}, {pipeline_mode = #tpu.pipeline_mode<synchronous>, transform_indices = @transform_1, window_bounds = array<i64: 128, 256>}, {pipeline_mode = #tpu.pipeline_mode<synchronous>, transform_indices = @transform_2, window_bounds = array<i64: 1, 256>}, {pipeline_mode = #tpu.pipeline_mode<synchronous>, transform_indices = @transform_3, window_bounds = array<i64: 1, 128>}, {pipeline_mode = #tpu.pipeline_mode<synchronous>, transform_indices = @transform_4, window_bounds = array<i64: 1, 128>}, {pipeline_mode = #tpu.pipeline_mode<synchronous>, transform_indices = @transform_5, window_bounds = array<i64: 1, 128>}, {pipeline_mode = #tpu.pipeline_mode<synchronous>, transform_indices = @transform_6, window_bounds = array<i64: 1, 128>}, {pipeline_mode = #tpu.pipeline_mode<synchronous>, transform_indices = @transform_7, window_bounds = array<i64: 256, 256>}, {pipeline_mode = #tpu.pipeline_mode<synchronous>, transform_indices = @transform_8, window_bounds = array<i64: 1, 256>}, {pipeline_mode = #tpu.pipeline_mode<synchronous>, transform_indices = @transform_9, window_bounds = array<i64: 256, 128>}, {pipeline_mode = #tpu.pipeline_mode<synchronous>, transform_indices = @transform_10, window_bounds = array<i64: 1, 128>}, {transform_indices = @transform_11, window_bounds = array<i64: 128, 128>}]} {
    %c0 = arith.constant 0 : index
    %c0_0 = arith.constant 0 : index
    %0 = vector.load %arg1[%c0, %c0_0] : memref<128x128xf32, #tpu.memory_space<vmem>>, vector<128x128xf32>
    %c0_1 = arith.constant 0 : index
    %c0_2 = arith.constant 0 : index
    %1 = vector.load %arg2[%c0_1, %c0_2] : memref<128x256xf32, #tpu.memory_space<vmem>>, vector<128x256xf32>
    %cst = arith.constant dense<0.000000e+00> : vector<128x256xf32>
    %2 = tpu.matmul %0, %1, %cst {dimension_numbers = #tpu.dot_dimension_numbers<[1], [0], [0], [1], [0, 0, 1, 1], [], []>} : vector<128x128xf32>, vector<128x256xf32>, vector<128x256xf32> -> vector<128x256xf32>
    %c0_3 = arith.constant 0 : index
    %c0_4 = arith.constant 0 : index
    %3 = vector.load %arg3[%c0_3, %c0_4] : memref<1x256xf32, #tpu.memory_space<vmem>>, vector<1x256xf32>
    %4 = vector.broadcast %3 : vector<1x256xf32> to vector<128x256xf32>
    %5 = arith.addf %2, %4 : vector<128x256xf32>
    %6 = vector.extract_strided_slice %5 {offsets = [0, 0], sizes = [128, 128], strides = [1, 1]} : vector<128x256xf32> to vector<128x128xf32>
    %c0_5 = arith.constant 0 : index
    %c0_6 = arith.constant 0 : index
    %7 = vector.load %arg4[%c0_5, %c0_6] : memref<1x128xf32, #tpu.memory_space<vmem>>, vector<1x128xf32>
    %c0_7 = arith.constant 0 : index
    %c0_8 = arith.constant 0 : index
    %8 = vector.load %arg5[%c0_7, %c0_8] : memref<1x128xf32, #tpu.memory_space<vmem>>, vector<1x128xf32>
    %cst_9 = arith.constant dense<0.000000e+00> : vector<128xf32>
    %9 = vector.multi_reduction <add>, %6, %cst_9 [1] : vector<128x128xf32> to vector<128xf32>
    %10 = vector.shape_cast %9 : vector<128xf32> to vector<128x1xf32>
    %cst_10 = arith.constant 1.280000e+02 : f32
    %11 = vector.broadcast %cst_10 : f32 to vector<128x1xf32>
    %12 = arith.divf %10, %11 : vector<128x1xf32>
    %13 = vector.broadcast %12 : vector<128x1xf32> to vector<128x128xf32>
    %14 = arith.subf %6, %13 : vector<128x128xf32>
    %15 = arith.mulf %14, %14 : vector<128x128xf32>
    %cst_11 = arith.constant dense<0.000000e+00> : vector<128xf32>
    %16 = vector.multi_reduction <add>, %15, %cst_11 [1] : vector<128x128xf32> to vector<128xf32>
    %17 = vector.shape_cast %16 : vector<128xf32> to vector<128x1xf32>
    %cst_12 = arith.constant 1.280000e+02 : f32
    %18 = vector.broadcast %cst_12 : f32 to vector<128x1xf32>
    %19 = arith.divf %17, %18 : vector<128x1xf32>
    %20 = vector.broadcast %12 : vector<128x1xf32> to vector<128x128xf32>
    %21 = arith.subf %6, %20 : vector<128x128xf32>
    %cst_13 = arith.constant 9.99999974E-6 : f32
    %22 = vector.broadcast %cst_13 : f32 to vector<128x1xf32>
    %23 = arith.addf %19, %22 : vector<128x1xf32>
    %24 = math.rsqrt %23 : vector<128x1xf32>
    %25 = vector.broadcast %24 : vector<128x1xf32> to vector<128x128xf32>
    %26 = arith.mulf %21, %25 : vector<128x128xf32>
    %27 = vector.broadcast %7 : vector<1x128xf32> to vector<128x128xf32>
    %28 = arith.mulf %26, %27 : vector<128x128xf32>
    %29 = vector.broadcast %8 : vector<1x128xf32> to vector<128x128xf32>
    %30 = arith.addf %28, %29 : vector<128x128xf32>
    %31 = math.tanh %30 : vector<128x128xf32>
    %32 = vector.extract_strided_slice %5 {offsets = [0, 128], sizes = [128, 128], strides = [1, 1]} : vector<128x256xf32> to vector<128x128xf32>
    %c0_14 = arith.constant 0 : index
    %c0_15 = arith.constant 0 : index
    %33 = vector.load %arg6[%c0_14, %c0_15] : memref<1x128xf32, #tpu.memory_space<vmem>>, vector<1x128xf32>
    %c0_16 = arith.constant 0 : index
    %c0_17 = arith.constant 0 : index
    %34 = vector.load %arg7[%c0_16, %c0_17] : memref<1x128xf32, #tpu.memory_space<vmem>>, vector<1x128xf32>
    %cst_18 = arith.constant dense<0.000000e+00> : vector<128xf32>
    %35 = vector.multi_reduction <add>, %32, %cst_18 [1] : vector<128x128xf32> to vector<128xf32>
    %36 = vector.shape_cast %35 : vector<128xf32> to vector<128x1xf32>
    %cst_19 = arith.constant 1.280000e+02 : f32
    %37 = vector.broadcast %cst_19 : f32 to vector<128x1xf32>
    %38 = arith.divf %36, %37 : vector<128x1xf32>
    %39 = vector.broadcast %38 : vector<128x1xf32> to vector<128x128xf32>
    %40 = arith.subf %32, %39 : vector<128x128xf32>
    %41 = arith.mulf %40, %40 : vector<128x128xf32>
    %cst_20 = arith.constant dense<0.000000e+00> : vector<128xf32>
    %42 = vector.multi_reduction <add>, %41, %cst_20 [1] : vector<128x128xf32> to vector<128xf32>
    %43 = vector.shape_cast %42 : vector<128xf32> to vector<128x1xf32>
    %cst_21 = arith.constant 1.280000e+02 : f32
    %44 = vector.broadcast %cst_21 : f32 to vector<128x1xf32>
    %45 = arith.divf %43, %44 : vector<128x1xf32>
    %46 = vector.broadcast %38 : vector<128x1xf32> to vector<128x128xf32>
    %47 = arith.subf %32, %46 : vector<128x128xf32>
    %cst_22 = arith.constant 9.99999974E-6 : f32
    %48 = vector.broadcast %cst_22 : f32 to vector<128x1xf32>
    %49 = arith.addf %45, %48 : vector<128x1xf32>
    %50 = math.rsqrt %49 : vector<128x1xf32>
    %51 = vector.broadcast %50 : vector<128x1xf32> to vector<128x128xf32>
    %52 = arith.mulf %47, %51 : vector<128x128xf32>
    %53 = vector.broadcast %33 : vector<1x128xf32> to vector<128x128xf32>
    %54 = arith.mulf %52, %53 : vector<128x128xf32>
    %55 = vector.broadcast %34 : vector<1x128xf32> to vector<128x128xf32>
    %56 = arith.addf %54, %55 : vector<128x128xf32>
    %57 = math.tanh %56 : vector<128x128xf32>
    %58 = tpu.concatenate %31, %57 in 1 : vector<128x128xf32>, vector<128x128xf32> -> vector<128x256xf32>
    %c0_23 = arith.constant 0 : index
    %c0_24 = arith.constant 0 : index
    %59 = vector.load %arg8[%c0_23, %c0_24] : memref<256x256xf32, #tpu.memory_space<vmem>>, vector<256x256xf32>
    %cst_25 = arith.constant dense<0.000000e+00> : vector<128x256xf32>
    %60 = tpu.matmul %58, %59, %cst_25 {dimension_numbers = #tpu.dot_dimension_numbers<[1], [0], [0], [1], [0, 0, 1, 1], [], []>} : vector<128x256xf32>, vector<256x256xf32>, vector<128x256xf32> -> vector<128x256xf32>
    %c0_26 = arith.constant 0 : index
    %c0_27 = arith.constant 0 : index
    %61 = vector.load %arg9[%c0_26, %c0_27] : memref<1x256xf32, #tpu.memory_space<vmem>>, vector<1x256xf32>
    %62 = vector.broadcast %61 : vector<1x256xf32> to vector<128x256xf32>
    %63 = arith.addf %60, %62 : vector<128x256xf32>
    %cst_28 = arith.constant 0.000000e+00 : f32
    %64 = vector.broadcast %cst_28 : f32 to vector<128x256xf32>
    %65 = arith.maximumf %63, %64 : vector<128x256xf32>
    %c0_29 = arith.constant 0 : index
    %c0_30 = arith.constant 0 : index
    %66 = vector.load %arg10[%c0_29, %c0_30] : memref<256x128xf32, #tpu.memory_space<vmem>>, vector<256x128xf32>
    %cst_31 = arith.constant dense<0.000000e+00> : vector<128x128xf32>
    %67 = tpu.matmul %65, %66, %cst_31 {dimension_numbers = #tpu.dot_dimension_numbers<[1], [0], [0], [1], [0, 0, 1, 1], [], []>} : vector<128x256xf32>, vector<256x128xf32>, vector<128x128xf32> -> vector<128x128xf32>
    %c0_32 = arith.constant 0 : index
    %c0_33 = arith.constant 0 : index
    %68 = vector.load %arg11[%c0_32, %c0_33] : memref<1x128xf32, #tpu.memory_space<vmem>>, vector<1x128xf32>
    %69 = vector.broadcast %68 : vector<1x128xf32> to vector<128x128xf32>
    %70 = arith.addf %67, %69 : vector<128x128xf32>
    %c0_34 = arith.constant 0 : index
    %c0_35 = arith.constant 0 : index
    %71 = vector.load %arg12[%c0_34, %c0_35] : memref<128x128xf32, #tpu.memory_space<vmem>>, vector<128x128xf32>
    tpu.vector_store %arg12[%c0_34, %c0_35], %70 {strides = array<i32>} : memref<128x128xf32, #tpu.memory_space<vmem>>, vector<128x128xf32>,
    return
  }
  func.func @transform_0(%arg0: i32) -> (i32, i32) {
    %c0_i32 = arith.constant 0 : i32
    %c0_i32_0 = arith.constant 0 : i32
    return %arg0, %c0_i32 : i32, i32
  }
  func.func @transform_1(%arg0: i32) -> (i32, i32) {
    %c0_i32 = arith.constant 0 : i32
    %c0_i32_0 = arith.constant 0 : i32
    %c0_i32_1 = arith.constant 0 : i32
    return %c0_i32, %c0_i32_0 : i32, i32
  }
  func.func @transform_2(%arg0: i32) -> (i32, i32) {
    %c0_i32 = arith.constant 0 : i32
    %c0_i32_0 = arith.constant 0 : i32
    %c0_i32_1 = arith.constant 0 : i32
    return %c0_i32, %c0_i32_0 : i32, i32
  }
  func.func @transform_3(%arg0: i32) -> (i32, i32) {
    %c0_i32 = arith.constant 0 : i32
    %c0_i32_0 = arith.constant 0 : i32
    %c0_i32_1 = arith.constant 0 : i32
    return %c0_i32, %c0_i32_0 : i32, i32
  }
  func.func @transform_4(%arg0: i32) -> (i32, i32) {
    %c0_i32 = arith.constant 0 : i32
    %c0_i32_0 = arith.constant 0 : i32
    %c0_i32_1 = arith.constant 0 : i32
    return %c0_i32, %c0_i32_0 : i32, i32
  }
  func.func @transform_5(%arg0: i32) -> (i32, i32) {
    %c0_i32 = arith.constant 0 : i32
    %c0_i32_0 = arith.constant 0 : i32
    %c0_i32_1 = arith.constant 0 : i32
    return %c0_i32, %c0_i32_0 : i32, i32
  }
  func.func @transform_6(%arg0: i32) -> (i32, i32) {
    %c0_i32 = arith.constant 0 : i32
    %c0_i32_0 = arith.constant 0 : i32
    %c0_i32_1 = arith.constant 0 : i32
    return %c0_i32, %c0_i32_0 : i32, i32
  }
  func.func @transform_7(%arg0: i32) -> (i32, i32) {
    %c0_i32 = arith.constant 0 : i32
    %c0_i32_0 = arith.constant 0 : i32
    %c0_i32_1 = arith.constant 0 : i32
    return %c0_i32, %c0_i32_0 : i32, i32
  }
  func.func @transform_8(%arg0: i32) -> (i32, i32) {
    %c0_i32 = arith.constant 0 : i32
    %c0_i32_0 = arith.constant 0 : i32
    %c0_i32_1 = arith.constant 0 : i32
    return %c0_i32, %c0_i32_0 : i32, i32
  }
  func.func @transform_9(%arg0: i32) -> (i32, i32) {
    %c0_i32 = arith.constant 0 : i32
    %c0_i32_0 = arith.constant 0 : i32
    %c0_i32_1 = arith.constant 0 : i32
    return %c0_i32, %c0_i32_0 : i32, i32
  }
  func.func @transform_10(%arg0: i32) -> (i32, i32) {
    %c0_i32 = arith.constant 0 : i32
    %c0_i32_0 = arith.constant 0 : i32
    %c0_i32_1 = arith.constant 0 : i32
    return %c0_i32, %c0_i32_0 : i32, i32
  }
  func.func @transform_11(%arg0: i32) -> (i32, i32) {
    %c0_i32 = arith.constant 0 : i32
    %c0_i32_0 = arith.constant 0 : i32
    return %arg0, %c0_i32 : i32, i32
  }
}

</mosaic_0001>

<llo_original>
// kernel: tpu_custom_call.1
$region0: #{tpu_custom_call.1}
  #allocation0 [shape = 'u32[]', space=smem, size = 0x4, offset = 0x4, fixed_abs, tag = 'smem constant byte address 0x4 - core index']
  #allocation1 [shape = 'u32[144,128]{1,0:T(1,128)}', space=vmem, size = 0x12000, scoped, tag = 'internal scratch']
  %s0 = inlined_call_operand.hbm [shape: f32[256,128], index: 0, kind: input, shape index: {}]
  %s1 = inlined_call_operand.hbm [shape: f32[128,256], index: 1, kind: input, shape index: {}]
  %s2 = inlined_call_operand.vmem [shape: f32[1,256], index: 2, kind: input, shape index: {}]
  %s3 = inlined_call_operand.vmem [shape: f32[1,128], index: 3, kind: input, shape index: {}]
  %s4 = inlined_call_operand.vmem [shape: f32[1,128], index: 4, kind: input, shape index: {}]
  %s5 = inlined_call_operand.vmem [shape: f32[1,128], index: 5, kind: input, shape index: {}]
  %s6 = inlined_call_operand.vmem [shape: f32[1,128], index: 6, kind: input, shape index: {}]
  %s7 = inlined_call_operand.hbm [shape: f32[256,256], index: 7, kind: input, shape index: {}]
  %s8 = inlined_call_operand.vmem [shape: f32[1,256], index: 8, kind: input, shape index: {}]
  %s9 = inlined_call_operand.hbm [shape: f32[256,128], index: 9, kind: input, shape index: {}]
  %s10 = inlined_call_operand.vmem [shape: f32[1,128], index: 10, kind: input, shape index: {}]
  %s11 = inlined_call_operand.hbm [shape: f32[256,128], index: 11, kind: output, shape index: {}]
  %s12 = sld [smem:[#allocation0]]
  $region93: #{tpu_custom_call.1} parent=0
    _
  %s14 = ssub.s32 1, %s12
  %s15 = scalar_select 0, %s14, %s12
  $region1: #{tpu_custom_call.1} parent=0
    #allocation2 [shape = 'u8[131072]{0}', space=vmem, size = 0x20000, scoped, tag = 'input window, operand 0']
    #allocation3 [shape = 's32[2]{0}', space=sflag, size = 0x8, scoped, tag = 'scoped memory for tpu_custom_call.1']
    #allocation4 [shape = 's32[2]{0}', space=sflag, size = 0x8, scoped, tag = 'scoped memory for tpu_custom_call.1']
    #allocation5 [shape = 'u8[131072]{0}', space=vmem, size = 0x20000, scoped, tag = 'input window, operand 1, single buffered']
    #allocation6 [shape = 's32[1]{0}', space=sflag, size = 0x4, scoped, tag = 'scoped memory for tpu_custom_call.1']
    #allocation7 [shape = 'u8[262144]{0}', space=vmem, size = 0x40000, scoped, tag = 'input window, operand 7, single buffered']
    #allocation8 [shape = 'u8[131072]{0}', space=vmem, size = 0x20000, scoped, tag = 'input window, operand 9, single buffered']
    #allocation9 [shape = 's32[1]{0}', space=sflag, size = 0x4, scoped, tag = 'scoped memory for tpu_custom_call.1']
    #allocation10 [shape = 'u8[131072]{0}', space=vmem, size = 0x20000, scoped, tag = 'output window, operand 0']
    %16 = vsyncpa [#allocation3], 0
    %s17 = scalar_lea.sflag [#allocation3], 1
    %18 = vsyncpa %s17, 0
    %19 = vsyncpa [#allocation6], 0
    %20 = vsyncpa [#allocation9], 0
    %21 = vsyncpa [#allocation4], 0
    %s22 = scalar_lea.sflag [#allocation4], 1
    %23 = vsyncpa %s22, 0
    loop: start=0, step=1, limit=4
    $region2: #{tpu_custom_call.1} parent=1 // loop_pre_header
      _
    $region3: #{tpu_custom_call.1} parent=1 // loop_header
      %s25 = sphi 0, %s29
      %p26 = scmp.ge.s32.totalorder %s25, 4
      %s35 = sphi 0, %s37
      %s38 = sphi 0, %s35
      %s39 = sphi 0, %s38
      %s55 = sphi 0, %s39
      %s59 = sphi 0, %s59
      %s61 = sphi 0, %s59
      %s62 = sphi 0, %s61
      %s76 = sphi 0, %s62
      %s80 = sphi 0, %s80
      %s82 = sphi 0, %s80
      %s83 = sphi 0, %s82
      %s97 = sphi 0, %s83
      %s101 = sphi 0, %s101
      %s103 = sphi 0, %s101
      %s104 = sphi 0, %s103
      %s118 = sphi 0, %s104
      %s122 = sphi 0, %s122
      %s124 = sphi 0, %s122
      %s125 = sphi 0, %s124
      %s139 = sphi 0, %s125
      %s143 = sphi 0, %s143
      %s145 = sphi 0, %s143
      %s146 = sphi 0, %s145
      %s160 = sphi 0, %s146
      %s164 = sphi 0, %s164
      %s166 = sphi 0, %s164
      %s167 = sphi 0, %s166
      %s181 = sphi 0, %s167
      %s185 = sphi 0, %s185
      %s187 = sphi 0, %s185
      %s188 = sphi 0, %s187
      %s202 = sphi 0, %s188
      %s206 = sphi 0, %s206
      %s208 = sphi 0, %s206
      %s209 = sphi 0, %s208
      %s223 = sphi 0, %s209
      %s227 = sphi 0, %s227
      %s229 = sphi 0, %s227
      %s230 = sphi 0, %s229
      %s244 = sphi 0, %s230
      %s248 = sphi 0, %s248
      %s250 = sphi 0, %s248
      %s251 = sphi 0, %s250
      %s265 = sphi 0, %s251
      %s271 = sphi 0, %s273
      %s274 = sphi 0, %s271
      %s275 = sphi 0, %s274
      %s291 = sphi 0, %s275
    $region4: #{tpu_custom_call.1} parent=1 // loop_header_branch
      %28 = sbr.rel (%p26) target = $region8
    $region5: #{tpu_custom_call.1} parent=1 // loop_body
      %s30 = ssub.s32 %s25, 1
      %s31 = ssub.s32 %s25, 2
      %s32 = sadd.s32 %s25, 1
      %s33 = ssub.s32 %s25, %s32
      %p34 = scmp.eq.s32.totalorder %s33, 0
      %s36 = sadd.s32 %s35, 1
      %s37 = scalar_select %p34, %s35, %s36
      %p40 = pneg %p34
      %p41 = scmp.eq.s32.totalorder %s25, 1
      %p42 = por %p40, %p41
      %p43 = scmp.ne.s32.totalorder %s35, %s38
      %p44 = scmp.eq.s32.totalorder %s25, 0
      %p45 = por %p43, %p44
      %p46 = scmp.ne.s32.totalorder %s35, %s38
      %p47 = scmp.eq.s32.totalorder %s30, 1
      %p48 = por %p46, %p47
      %p49 = scmp.ne.s32.totalorder %s38, %s39
      %p50 = scmp.eq.s32.totalorder %s30, 0
      %p51 = por %p49, %p50
      %p52 = scmp.ne.s32.totalorder %s38, %s39
      %p53 = scmp.eq.s32.totalorder %s31, 1
      %p54 = por %p52, %p53
      %p56 = scmp.ne.s32.totalorder %s39, %s55
      %p57 = scmp.eq.s32.totalorder %s31, 0
      %p58 = por %p56, %p57
      %s60 = sadd.s32 %s59, 1
      %p63 = scmp.eq.s32.totalorder %s25, 1
      %p64 = scmp.ne.s32.totalorder %s59, %s61
      %p65 = scmp.eq.s32.totalorder %s25, 0
      %p66 = por %p64, %p65
      %p67 = scmp.ne.s32.totalorder %s59, %s61
      %p68 = scmp.eq.s32.totalorder %s30, 1
      %p69 = por %p67, %p68
      %p70 = scmp.ne.s32.totalorder %s61, %s62
      %p71 = scmp.eq.s32.totalorder %s30, 0
      %p72 = por %p70, %p71
      %p73 = scmp.ne.s32.totalorder %s61, %s62
      %p74 = scmp.eq.s32.totalorder %s31, 1
      %p75 = por %p73, %p74
      %p77 = scmp.ne.s32.totalorder %s62, %s76
      %p78 = scmp.eq.s32.totalorder %s31, 0
      %p79 = por %p77, %p78
      %s81 = sadd.s32 %s80, 1
      %p84 = scmp.eq.s32.totalorder %s25, 1
      %p85 = scmp.ne.s32.totalorder %s80, %s82
      %p86 = scmp.eq.s32.totalorder %s25, 0
      %p87 = por %p85, %p86
      %p88 = scmp.ne.s32.totalorder %s80, %s82
      %p89 = scmp.eq.s32.totalorder %s30, 1
      %p90 = por %p88, %p89
      %p91 = scmp.ne.s32.totalorder %s82, %s83
      %p92 = scmp.eq.s32.totalorder %s30, 0
      %p93 = por %p91, %p92
      %p94 = scmp.ne.s32.totalorder %s82, %s83
      %p95 = scmp.eq.s32.totalorder %s31, 1
      %p96 = por %p94, %p95
      %p98 = scmp.ne.s32.totalorder %s83, %s97
      %p99 = scmp.eq.s32.totalorder %s31, 0
      %p100 = por %p98, %p99
      %s102 = sadd.s32 %s101, 1
      %p105 = scmp.eq.s32.totalorder %s25, 1
      %p106 = scmp.ne.s32.totalorder %s101, %s103
      %p107 = scmp.eq.s32.totalorder %s25, 0
      %p108 = por %p106, %p107
      %p109 = scmp.ne.s32.totalorder %s101, %s103
      %p110 = scmp.eq.s32.totalorder %s30, 1
      %p111 = por %p109, %p110
      %p112 = scmp.ne.s32.totalorder %s103, %s104
      %p113 = scmp.eq.s32.totalorder %s30, 0
      %p114 = por %p112, %p113
      %p115 = scmp.ne.s32.totalorder %s103, %s104
      %p116 = scmp.eq.s32.totalorder %s31, 1
      %p117 = por %p115, %p116
      %p119 = scmp.ne.s32.totalorder %s104, %s118
      %p120 = scmp.eq.s32.totalorder %s31, 0
      %p121 = por %p119, %p120
      %s123 = sadd.s32 %s122, 1
      %p126 = scmp.eq.s32.totalorder %s25, 1
      %p127 = scmp.ne.s32.totalorder %s122, %s124
      %p128 = scmp.eq.s32.totalorder %s25, 0
      %p129 = por %p127, %p128
      %p130 = scmp.ne.s32.totalorder %s122, %s124
      %p131 = scmp.eq.s32.totalorder %s30, 1
      %p132 = por %p130, %p131
      %p133 = scmp.ne.s32.totalorder %s124, %s125
      %p134 = scmp.eq.s32.totalorder %s30, 0
      %p135 = por %p133, %p134
      %p136 = scmp.ne.s32.totalorder %s124, %s125
      %p137 = scmp.eq.s32.totalorder %s31, 1
      %p138 = por %p136, %p137
      %p140 = scmp.ne.s32.totalorder %s125, %s139
      %p141 = scmp.eq.s32.totalorder %s31, 0
      %p142 = por %p140, %p141
      %s144 = sadd.s32 %s143, 1
      %p147 = scmp.eq.s32.totalorder %s25, 1
      %p148 = scmp.ne.s32.totalorder %s143, %s145
      %p149 = scmp.eq.s32.totalorder %s25, 0
      %p150 = por %p148, %p149
      %p151 = scmp.ne.s32.totalorder %s143, %s145
      %p152 = scmp.eq.s32.totalorder %s30, 1
      %p153 = por %p151, %p152
      %p154 = scmp.ne.s32.totalorder %s145, %s146
      %p155 = scmp.eq.s32.totalorder %s30, 0
      %p156 = por %p154, %p155
      %p157 = scmp.ne.s32.totalorder %s145, %s146
      %p158 = scmp.eq.s32.totalorder %s31, 1
      %p159 = por %p157, %p158
      %p161 = scmp.ne.s32.totalorder %s146, %s160
      %p162 = scmp.eq.s32.totalorder %s31, 0
      %p163 = por %p161, %p162
      %s165 = sadd.s32 %s164, 1
      %p168 = scmp.eq.s32.totalorder %s25, 1
      %p169 = scmp.ne.s32.totalorder %s164, %s166
      %p170 = scmp.eq.s32.totalorder %s25, 0
      %p171 = por %p169, %p170
      %p172 = scmp.ne.s32.totalorder %s164, %s166
      %p173 = scmp.eq.s32.totalorder %s30, 1
      %p174 = por %p172, %p173
      %p175 = scmp.ne.s32.totalorder %s166, %s167
      %p176 = scmp.eq.s32.totalorder %s30, 0
      %p177 = por %p175, %p176
      %p178 = scmp.ne.s32.totalorder %s166, %s167
      %p179 = scmp.eq.s32.totalorder %s31, 1
      %p180 = por %p178, %p179
      %p182 = scmp.ne.s32.totalorder %s167, %s181
      %p183 = scmp.eq.s32.totalorder %s31, 0
      %p184 = por %p182, %p183
      %s186 = sadd.s32 %s185, 1
      %p189 = scmp.eq.s32.totalorder %s25, 1
      %p190 = scmp.ne.s32.totalorder %s185, %s187
      %p191 = scmp.eq.s32.totalorder %s25, 0
      %p192 = por %p190, %p191
      %p193 = scmp.ne.s32.totalorder %s185, %s187
      %p194 = scmp.eq.s32.totalorder %s30, 1
      %p195 = por %p193, %p194
      %p196 = scmp.ne.s32.totalorder %s187, %s188
      %p197 = scmp.eq.s32.totalorder %s30, 0
      %p198 = por %p196, %p197
      %p199 = scmp.ne.s32.totalorder %s187, %s188
      %p200 = scmp.eq.s32.totalorder %s31, 1
      %p201 = por %p199, %p200
      %p203 = scmp.ne.s32.totalorder %s188, %s202
      %p204 = scmp.eq.s32.totalorder %s31, 0
      %p205 = por %p203, %p204
      %s207 = sadd.s32 %s206, 1
      %p210 = scmp.eq.s32.totalorder %s25, 1
      %p211 = scmp.ne.s32.totalorder %s206, %s208
      %p212 = scmp.eq.s32.totalorder %s25, 0
      %p213 = por %p211, %p212
      %p214 = scmp.ne.s32.totalorder %s206, %s208
      %p215 = scmp.eq.s32.totalorder %s30, 1
      %p216 = por %p214, %p215
      %p217 = scmp.ne.s32.totalorder %s208, %s209
      %p218 = scmp.eq.s32.totalorder %s30, 0
      %p219 = por %p217, %p218
      %p220 = scmp.ne.s32.totalorder %s208, %s209
      %p221 = scmp.eq.s32.totalorder %s31, 1
      %p222 = por %p220, %p221
      %p224 = scmp.ne.s32.totalorder %s209, %s223
      %p225 = scmp.eq.s32.totalorder %s31, 0
      %p226 = por %p224, %p225
      %s228 = sadd.s32 %s227, 1
      %p231 = scmp.eq.s32.totalorder %s25, 1
      %p232 = scmp.ne.s32.totalorder %s227, %s229
      %p233 = scmp.eq.s32.totalorder %s25, 0
      %p234 = por %p232, %p233
      %p235 = scmp.ne.s32.totalorder %s227, %s229
      %p236 = scmp.eq.s32.totalorder %s30, 1
      %p237 = por %p235, %p236
      %p238 = scmp.ne.s32.totalorder %s229, %s230
      %p239 = scmp.eq.s32.totalorder %s30, 0
      %p240 = por %p238, %p239
      %p241 = scmp.ne.s32.totalorder %s229, %s230
      %p242 = scmp.eq.s32.totalorder %s31, 1
      %p243 = por %p241, %p242
      %p245 = scmp.ne.s32.totalorder %s230, %s244
      %p246 = scmp.eq.s32.totalorder %s31, 0
      %p247 = por %p245, %p246
      %s249 = sadd.s32 %s248, 1
      %p252 = scmp.eq.s32.totalorder %s25, 1
      %p253 = scmp.ne.s32.totalorder %s248, %s250
      %p254 = scmp.eq.s32.totalorder %s25, 0
      %p255 = por %p253, %p254
      %p256 = scmp.ne.s32.totalorder %s248, %s250
      %p257 = scmp.eq.s32.totalorder %s30, 1
      %p258 = por %p256, %p257
      %p259 = scmp.ne.s32.totalorder %s250, %s251
      %p260 = scmp.eq.s32.totalorder %s30, 0
      %p261 = por %p259, %p260
      %p262 = scmp.ne.s32.totalorder %s250, %s251
      %p263 = scmp.eq.s32.totalorder %s31, 1
      %p264 = por %p262, %p263
      %p266 = scmp.ne.s32.totalorder %s251, %s265
      %p267 = scmp.eq.s32.totalorder %s31, 0
      %p268 = por %p266, %p267
      %s269 = ssub.s32 %s25, %s32
      %p270 = scmp.eq.s32.totalorder %s269, 0
      %s272 = sadd.s32 %s271, 1
      %s273 = scalar_select %p270, %s271, %s272
      %p276 = pneg %p270
      %p277 = scmp.eq.s32.totalorder %s25, 1
      %p278 = por %p276, %p277
      %p279 = scmp.ne.s32.totalorder %s271, %s274
      %p280 = scmp.eq.s32.totalorder %s25, 0
      %p281 = por %p279, %p280
      %p282 = scmp.ne.s32.totalorder %s271, %s274
      %p283 = scmp.eq.s32.totalorder %s30, 1
      %p284 = por %p282, %p283
      %p285 = scmp.ne.s32.totalorder %s274, %s275
      %p286 = scmp.eq.s32.totalorder %s30, 0
      %p287 = por %p285, %p286
      %p288 = scmp.ne.s32.totalorder %s274, %s275
      %p289 = scmp.eq.s32.totalorder %s31, 1
      %p290 = por %p288, %p289
      %p292 = scmp.ne.s32.totalorder %s275, %s291
      %p293 = scmp.eq.s32.totalorder %s31, 0
      %p294 = por %p292, %p293
      %p295 = scmp.le.s32.totalorder 1, %s25
      %p296 = scmp.lt.s32.totalorder %s25, 3
      %p297 = pnand %p295, %p296
      %p298 = pneg %p297
      // Predicated region
      $region9: #{tpu_custom_call.1} parent=5 // pred_check
        _
      $region10: #{tpu_custom_call.1} parent=5 // pred_check_branch
        %300 = sbr.rel (%p297) target = $region12
      $region11: #{tpu_custom_call.1} parent=5 // pred_region
        %s301 = ssub.s32 %s25, 1
        // Predicated region
        $region13: #{tpu_custom_call.1} parent=11 // pred_check
          %p302 = pneg %p72
        $region14: #{tpu_custom_call.1} parent=11 // pred_check_branch
          %304 = sbr.rel (%p302) target = $region16
        $region15: #{tpu_custom_call.1} parent=11 // pred_region
          %s306 = ssub.s32 4096, 4096
          %307 = vsyncadd [#allocation6], %s306
          %s308 = sshll.u32 [#allocation5], 4
          %s309 = int_to_ptr.vmem [resolvable:$true] %s308
          %314 = dma.hbm_to_vmem [thread:$0]  %s1, 4096, %s309, [#allocation6], 256, 256, 16
        $region16: #{tpu_custom_call.1} parent=11 // pred_fallthru
          _
        // Predicated region
        $region17: #{tpu_custom_call.1} parent=11 // pred_check
          %p315 = pneg %p93
        $region18: #{tpu_custom_call.1} parent=11 // pred_check_branch
          %317 = sbr.rel (%p315) target = $region20
        $region19: #{tpu_custom_call.1} parent=11 // pred_region
          _
        $region20: #{tpu_custom_call.1} parent=11 // pred_fallthru
          _
        // Predicated region
        $region21: #{tpu_custom_call.1} parent=11 // pred_check
          %p318 = pneg %p114
        $region22: #{tpu_custom_call.1} parent=11 // pred_check_branch
          %320 = sbr.rel (%p318) target = $region24
        $region23: #{tpu_custom_call.1} parent=11 // pred_region
          _
        $region24: #{tpu_custom_call.1} parent=11 // pred_fallthru
          _
        // Predicated region
        $region25: #{tpu_custom_call.1} parent=11 // pred_check
          %p321 = pneg %p135
        $region26: #{tpu_custom_call.1} parent=11 // pred_check_branch
          %323 = sbr.rel (%p321) target = $region28
        $region27: #{tpu_custom_call.1} parent=11 // pred_region
          _
        $region28: #{tpu_custom_call.1} parent=11 // pred_fallthru
          _
        // Predicated region
        $region29: #{tpu_custom_call.1} parent=11 // pred_check
          %p324 = pneg %p156
        $region30: #{tpu_custom_call.1} parent=11 // pred_check_branch
          %326 = sbr.rel (%p324) target = $region32
        $region31: #{tpu_custom_call.1} parent=11 // pred_region
          _
        $region32: #{tpu_custom_call.1} parent=11 // pred_fallthru
          _
        // Predicated region
        $region33: #{tpu_custom_call.1} parent=11 // pred_check
          %p327 = pneg %p177
        $region34: #{tpu_custom_call.1} parent=11 // pred_check_branch
          %329 = sbr.rel (%p327) target = $region36
        $region35: #{tpu_custom_call.1} parent=11 // pred_region
          _
        $region36: #{tpu_custom_call.1} parent=11 // pred_fallthru
          _
        // Predicated region
        $region37: #{tpu_custom_call.1} parent=11 // pred_check
          %p330 = pneg %p198
        $region38: #{tpu_custom_call.1} parent=11 // pred_check_branch
          %332 = sbr.rel (%p330) target = $region40
        $region39: #{tpu_custom_call.1} parent=11 // pred_region
          %s334 = ssub.s32 8192, 8192
          %335 = vsyncadd [#allocation6], %s334
          %s336 = sshll.u32 [#allocation7], 4
          %s337 = int_to_ptr.vmem [resolvable:$true] %s336
          %342 = dma.hbm_to_vmem [thread:$0]  %s7, 8192, %s337, [#allocation6], 256, 256, 16
        $region40: #{tpu_custom_call.1} parent=11 // pred_fallthru
          _
        // Predicated region
        $region41: #{tpu_custom_call.1} parent=11 // pred_check
          %p343 = pneg %p219
        $region42: #{tpu_custom_call.1} parent=11 // pred_check_branch
          %345 = sbr.rel (%p343) target = $region44
        $region43: #{tpu_custom_call.1} parent=11 // pred_region
          _
        $region44: #{tpu_custom_call.1} parent=11 // pred_fallthru
          _
        // Predicated region
        $region45: #{tpu_custom_call.1} parent=11 // pred_check
          %p346 = pneg %p240
        $region46: #{tpu_custom_call.1} parent=11 // pred_check_branch
          %348 = sbr.rel (%p346) target = $region48
        $region47: #{tpu_custom_call.1} parent=11 // pred_region
          %s350 = ssub.s32 4096, 4096
          %351 = vsyncadd [#allocation9], %s350
          %s352 = sshll.u32 [#allocation8], 4
          %s353 = int_to_ptr.vmem [resolvable:$true] %s352
          %358 = dma.hbm_to_vmem [thread:$0]  %s9, 4096, %s353, [#allocation9], 128, 128, 8
        $region48: #{tpu_custom_call.1} parent=11 // pred_fallthru
          _
        // Predicated region
        $region49: #{tpu_custom_call.1} parent=11 // pred_check
          %p359 = pneg %p261
        $region50: #{tpu_custom_call.1} parent=11 // pred_check_branch
          %361 = sbr.rel (%p359) target = $region52
        $region51: #{tpu_custom_call.1} parent=11 // pred_region
          _
        $region52: #{tpu_custom_call.1} parent=11 // pred_fallthru
          _
      $region12: #{tpu_custom_call.1} parent=5 // pred_fallthru
        _
      %p362 = scmp.lt.s32.totalorder %s25, 2
      // Predicated region
      $region53: #{tpu_custom_call.1} parent=5 // pred_check
        %p363 = pneg %p362
      $region54: #{tpu_custom_call.1} parent=5 // pred_check_branch
        %365 = sbr.rel (%p363) target = $region56
      $region55: #{tpu_custom_call.1} parent=5 // pred_region
        // Predicated region
        $region57: #{tpu_custom_call.1} parent=55 // pred_check
          %p366 = pneg %p45
        $region58: #{tpu_custom_call.1} parent=55 // pred_check_branch
          %368 = sbr.rel (%p366) target = $region60
        $region59: #{tpu_custom_call.1} parent=55 // pred_region
          %s369 = sand.u32 %s35, 1
          %s370 = scalar_lea.sflag [#allocation3], %s369
          %s371 = sand.u32 %s35, 1
          %s372 = smul.addr %s371, 128
          %s373 = scalar_lea.vmem [#allocation2], %s372
          %s374 = smul.u32 16, %s25
          %s376 = ssub.s32 2048, 2048
          %377 = vsyncadd %s370, %s376
          %s378 = smul.addr %s374, 128
          %s379 = scalar_lea.hbm %s0, %s378
          %s380 = sshll.u32 %s373, 4
          %s381 = int_to_ptr.vmem [resolvable:$true] %s380
          %386 = dma.hbm_to_vmem [thread:$0]  %s379, 2048, %s381, %s370, 128, 128, 8
        $region60: #{tpu_custom_call.1} parent=55 // pred_fallthru
          _
      $region56: #{tpu_custom_call.1} parent=5 // pred_fallthru
        _
      %p387 = scmp.le.s32.totalorder 1, %s25
      %p388 = scmp.lt.s32.totalorder %s25, 3
      %p389 = pnand %p387, %p388
      %p390 = pneg %p389
      // Predicated region
      $region61: #{tpu_custom_call.1} parent=5 // pred_check
        _
      $region62: #{tpu_custom_call.1} parent=5 // pred_check_branch
        %392 = sbr.rel (%p389) target = $region64
      $region63: #{tpu_custom_call.1} parent=5 // pred_region
        %s393 = ssub.s32 %s25, 1
        %s394 = sand.u32 %s38, 1
        %s395 = scalar_lea.sflag [#allocation3], %s394
        %s396 = sand.u32 %s38, 1
        %s397 = smul.addr %s396, 128
        %s398 = scalar_lea.vmem [#allocation2], %s397
        // Predicated region
        $region65: #{tpu_custom_call.1} parent=63 // pred_check
          %p399 = pneg %p51
        $region66: #{tpu_custom_call.1} parent=63 // pred_check_branch
          %401 = sbr.rel (%p399) target = $region68
        $region67: #{tpu_custom_call.1} parent=63 // pred_region
          %402 = dma.done %s395, 2048
        $region68: #{tpu_custom_call.1} parent=63 // pred_fallthru
          _
        // Predicated region
        $region69: #{tpu_custom_call.1} parent=63 // pred_check
          %p403 = pneg %p72
        $region70: #{tpu_custom_call.1} parent=63 // pred_check_branch
          %405 = sbr.rel (%p403) target = $region72
        $region71: #{tpu_custom_call.1} parent=63 // pred_region
          %406 = dma.done [#allocation6], 4096
        $region72: #{tpu_custom_call.1} parent=63 // pred_fallthru
          _
        // Predicated region
        $region73: #{tpu_custom_call.1} parent=63 // pred_check
          %p407 = pneg %p198
        $region74: #{tpu_custom_call.1} parent=63 // pred_check_branch
          %409 = sbr.rel (%p407) target = $region76
        $region75: #{tpu_custom_call.1} parent=63 // pred_region
          %410 = dma.done [#allocation6], 8192
        $region76: #{tpu_custom_call.1} parent=63 // pred_fallthru
          _
        // Predicated region
        $region77: #{tpu_custom_call.1} parent=63 // pred_check
          %p411 = pneg %p240
        $region78: #{tpu_custom_call.1} parent=63 // pred_check_branch
          %413 = sbr.rel (%p411) target = $region80
        $region79: #{tpu_custom_call.1} parent=63 // pred_region
          %414 = dma.done [#allocation9], 4096
        $region80: #{tpu_custom_call.1} parent=63 // pred_fallthru
          _
        %s415 = sand.u32 %s38, 1
        %s416 = scalar_lea.sflag [#allocation3], %s415
        %s417 = sand.u32 %s38, 1
        %s418 = smul.addr %s417, 128
        %s419 = scalar_lea.vmem [#allocation2], %s418
        %p420 = pneg %p51
        %p421 = pneg %p48
        %p422 = pneg %p72
        %p423 = pneg %p69
        %p424 = pneg %p93
        %p425 = pneg %p90
        %p426 = pneg %p114
        %p427 = pneg %p111
        %p428 = pneg %p135
        %p429 = pneg %p132
        %p430 = pneg %p156
        %p431 = pneg %p153
        %p432 = pneg %p177
        %p433 = pneg %p174
        %p434 = pneg %p198
        %p435 = pneg %p195
        %p436 = pneg %p219
        %p437 = pneg %p216
        %p438 = pneg %p240
        %p439 = pneg %p237
        %p440 = pneg %p261
        %p441 = pneg %p258
        %p442 = pneg %p287
        %p443 = pneg %p284
        %s444 = sand.u32 %s274, 1
        %s445 = scalar_lea.sflag [#allocation4], %s444
        %s446 = sand.u32 %s274, 1
        %s447 = smul.addr %s446, 128
        %s448 = scalar_lea.vmem [#allocation10], %s447
        %s449 = smul.u32 16, %s30
        %s450 = smul.u32 16, %s30
        %v451 = vld [vmem:[%s398] sm:$0xff]
        %v452 = vld [vmem:[%s398 + $0x8] sm:$0xff]
        %v453 = vld [vmem:[%s398 + $0x10] sm:$0xff]
        %v454 = vld [vmem:[%s398 + $0x18] sm:$0xff]
        %v455 = vld [vmem:[%s398 + $0x20] sm:$0xff]
        %v456 = vld [vmem:[%s398 + $0x28] sm:$0xff]
        %v457 = vld [vmem:[%s398 + $0x30] sm:$0xff]
        %v458 = vld [vmem:[%s398 + $0x38] sm:$0xff]
        %v459 = vld [vmem:[%s398 + $0x40] sm:$0xff]
        %v460 = vld [vmem:[%s398 + $0x48] sm:$0xff]
        %v461 = vld [vmem:[%s398 + $0x50] sm:$0xff]
        %v462 = vld [vmem:[%s398 + $0x58] sm:$0xff]
        %v463 = vld [vmem:[%s398 + $0x60] sm:$0xff]
        %v464 = vld [vmem:[%s398 + $0x68] sm:$0xff]
        %v465 = vld [vmem:[%s398 + $0x70] sm:$0xff]
        %v466 = vld [vmem:[%s398 + $0x78] sm:$0xff]
        %v467 = vld [vmem:[#allocation5] sm:$0xff]
        %v468 = vld [vmem:[#allocation5 + $0x8] sm:$0xff]
        %v469 = vld [vmem:[#allocation5 + $0x10] sm:$0xff]
        %v470 = vld [vmem:[#allocation5 + $0x18] sm:$0xff]
        %v471 = vld [vmem:[#allocation5 + $0x20] sm:$0xff]
        %v472 = vld [vmem:[#allocation5 + $0x28] sm:$0xff]
        %v473 = vld [vmem:[#allocation5 + $0x30] sm:$0xff]
        %v474 = vld [vmem:[#allocation5 + $0x38] sm:$0xff]
        %v475 = vld [vmem:[#allocation5 + $0x40] sm:$0xff]
        %v476 = vld [vmem:[#allocation5 + $0x48] sm:$0xff]
        %v477 = vld [vmem:[#allocation5 + $0x50] sm:$0xff]
        %v478 = vld [vmem:[#allocation5 + $0x58] sm:$0xff]
        %v479 = vld [vmem:[#allocation5 + $0x60] sm:$0xff]
        %v480 = vld [vmem:[#allocation5 + $0x68] sm:$0xff]
        %v481 = vld [vmem:[#allocation5 + $0x70] sm:$0xff]
        %v482 = vld [vmem:[#allocation5 + $0x78] sm:$0xff]
        %v483 = vld [vmem:[#allocation5 + $0x80] sm:$0xff]
        %v484 = vld [vmem:[#allocation5 + $0x88] sm:$0xff]
        %v485 = vld [vmem:[#allocation5 + $0x90] sm:$0xff]
        %v486 = vld [vmem:[#allocation5 + $0x98] sm:$0xff]
        %v487 = vld [vmem:[#allocation5 + $0xa0] sm:$0xff]
        %v488 = vld [vmem:[#allocation5 + $0xa8] sm:$0xff]
        %v489 = vld [vmem:[#allocation5 + $0xb0] sm:$0xff]
        %v490 = vld [vmem:[#allocation5 + $0xb8] sm:$0xff]
        %v491 = vld [vmem:[#allocation5 + $0xc0] sm:$0xff]
        %v492 = vld [vmem:[#allocation5 + $0xc8] sm:$0xff]
        %v493 = vld [vmem:[#allocation5 + $0xd0] sm:$0xff]
        %v494 = vld [vmem:[#allocation5 + $0xd8] sm:$0xff]
        %v495 = vld [vmem:[#allocation5 + $0xe0] sm:$0xff]
        %v496 = vld [vmem:[#allocation5 + $0xe8] sm:$0xff]
        %v497 = vld [vmem:[#allocation5 + $0xf0] sm:$0xff]
        %v498 = vld [vmem:[#allocation5 + $0xf8] sm:$0xff]
        %v499 = vld [vmem:[%s2] sm:$0x3]
        %v501 = vlaneseq
        %v502 = vshrl.u32 %v501, 7
        %v503 = vsub.s32 0, %v502
        %v504 = vrot.slane %v499, %v503
        %v505 = vlaneseq
        %v506 = vshrl.u32 %v505, 7
        %v507 = vsub.s32 1, %v506
        %v508 = vrot.slane %v499, %v507
        %511 = vmatprep.subr.mxu0 %v498
        %512 = vmatpush1.msra.mxu0 %v497
        %513 = vmatprep.subr.mxu0 %v496
        %514 = vmatpush1.msra.mxu0 %v495
        %515 = vmatprep.subr.mxu0 %v494
        %516 = vmatpush1.msra.mxu0 %v493
        %517 = vmatprep.subr.mxu0 %v492
        %518 = vmatpush1.msra.mxu0 %v491
        %519 = vmatprep.subr.mxu0 %v490
        %520 = vmatpush1.msra.mxu0 %v489
        %521 = vmatprep.subr.mxu0 %v488
        %522 = vmatpush1.msra.mxu0 %v487
        %523 = vmatprep.subr.mxu0 %v486
        %524 = vmatpush1.msra.mxu0 %v485
        %525 = vmatprep.subr.mxu0 %v484
        %526 = vmatpush1.msra.mxu0 %v483
        %527 = vmatprep.subr.mxu0 %v482
        %528 = vmatpush1.msra.mxu0 %v481
        %529 = vmatprep.subr.mxu0 %v480
        %530 = vmatpush1.msra.mxu0 %v479
        %531 = vmatprep.subr.mxu0 %v478
        %532 = vmatpush1.msra.mxu0 %v477
        %533 = vmatprep.subr.mxu0 %v476
        %534 = vmatpush1.msra.mxu0 %v475
        %535 = vmatprep.subr.mxu0 %v474
        %536 = vmatpush1.msra.mxu0 %v473
        %537 = vmatprep.subr.mxu0 %v472
        %538 = vmatpush1.msra.mxu0 %v471
        %539 = vmatprep.subr.mxu0 %v470
        %540 = vmatpush1.msra.mxu0 %v469
        %541 = vmatprep.subr.mxu0 %v468
        %542 = vmatpush1.msra.mxu0 %v467
        %543 = vmatprep.subr.mxu0 0.0
        %544 = vmatpush2.msra.mxu0 0.0
        %545 = vmatprep.subr.mxu0 0.0
        %546 = vmatpush2.msra.mxu0 0.0
        %547 = vmatprep.subr.mxu0 0.0
        %548 = vmatpush2.msra.mxu0 0.0
        %549 = vmatprep.subr.mxu0 0.0
        %550 = vmatpush2.msra.mxu0 0.0
        %551 = vmatprep.subr.mxu0 0.0
        %552 = vmatpush2.msra.mxu0 0.0
        %553 = vmatprep.subr.mxu0 0.0
        %554 = vmatpush2.msra.mxu0 0.0
        %555 = vmatprep.subr.mxu0 0.0
        %556 = vmatpush2.msra.mxu0 0.0
        %557 = vmatprep.subr.mxu0 0.0
        %558 = vmatpush2.msra.mxu0 0.0
        %559 = vmatprep.subr.mxu0 0.0
        %560 = vmatpush2.msra.mxu0 0.0
        %561 = vmatprep.subr.mxu0 0.0
        %562 = vmatpush2.msra.mxu0 0.0
        %563 = vmatprep.subr.mxu0 0.0
        %564 = vmatpush2.msra.mxu0 0.0
        %565 = vmatprep.subr.mxu0 0.0
        %566 = vmatpush2.msra.mxu0 0.0
        %567 = vmatprep.subr.mxu0 0.0
        %568 = vmatpush2.msra.mxu0 0.0
        %569 = vmatprep.subr.mxu0 0.0
        %570 = vmatpush2.msra.mxu0 0.0
        %571 = vmatprep.subr.mxu0 0.0
        %572 = vmatpush2.msra.mxu0 0.0
        %573 = vmatprep.subr.mxu0 0.0
        %574 = vmatpush2.msra.mxu0 0.0
        %575 = vmatprep.mubr.f32.mxu0 0.0
        %576 = vmatmul.mubr.f32.gmra.mxu0 %v451
        %v577 = vpop.f32.mrf.mxu0
        %v578 = vadd.f32 %v504, %v577
        %v579 = vpop.f32.mrf.mxu0
        %v580 = vadd.f32 %v508, %v579
        %581 = vmatprep.mubr.f32.mxu0 0.0
        %582 = vmatmul.mubr.f32.gmra.mxu0 %v452
        %v583 = vpop.f32.mrf.mxu0
        %v584 = vadd.f32 %v504, %v583
        %v585 = vpop.f32.mrf.mxu0
        %v586 = vadd.f32 %v508, %v585
        %587 = vmatprep.mubr.f32.mxu0 0.0
        %588 = vmatmul.mubr.f32.gmra.mxu0 %v453
        %v589 = vpop.f32.mrf.mxu0
        %v590 = vadd.f32 %v504, %v589
        %v591 = vpop.f32.mrf.mxu0
        %v592 = vadd.f32 %v508, %v591
        %593 = vmatprep.mubr.f32.mxu0 0.0
        %594 = vmatmul.mubr.f32.gmra.mxu0 %v454
        %v595 = vpop.f32.mrf.mxu0
        %v596 = vadd.f32 %v504, %v595
        %v597 = vpop.f32.mrf.mxu0
        %v598 = vadd.f32 %v508, %v597
        %599 = vmatprep.mubr.f32.mxu0 0.0
        %600 = vmatmul.mubr.f32.gmra.mxu0 %v455
        %v601 = vpop.f32.mrf.mxu0
        %v602 = vadd.f32 %v504, %v601
        %v603 = vpop.f32.mrf.mxu0
        %v604 = vadd.f32 %v508, %v603
        %605 = vmatprep.mubr.f32.mxu0 0.0
        %606 = vmatmul.mubr.f32.gmra.mxu0 %v456
        %v607 = vpop.f32.mrf.mxu0
        %v608 = vadd.f32 %v504, %v607
        %v609 = vpop.f32.mrf.mxu0
        %v610 = vadd.f32 %v508, %v609
        %611 = vmatprep.mubr.f32.mxu0 0.0
        %612 = vmatmul.mubr.f32.gmra.mxu0 %v457
        %v613 = vpop.f32.mrf.mxu0
        %v614 = vadd.f32 %v504, %v613
        %v615 = vpop.f32.mrf.mxu0
        %v616 = vadd.f32 %v508, %v615
        %617 = vmatprep.mubr.f32.mxu0 0.0
        %618 = vmatmul.mubr.f32.gmra.mxu0 %v458
        %v619 = vpop.f32.mrf.mxu0
        %v620 = vadd.f32 %v504, %v619
        %v621 = vpop.f32.mrf.mxu0
        %v622 = vadd.f32 %v508, %v621
        %623 = vmatprep.mubr.f32.mxu0 0.0
        %624 = vmatmul.mubr.f32.gmra.mxu0 %v459
        %v625 = vpop.f32.mrf.mxu0
        %v626 = vadd.f32 %v504, %v625
        %v627 = vpop.f32.mrf.mxu0
        %v628 = vadd.f32 %v508, %v627
        %629 = vmatprep.mubr.f32.mxu0 0.0
        %630 = vmatmul.mubr.f32.gmra.mxu0 %v460
        %v631 = vpop.f32.mrf.mxu0
        %v632 = vadd.f32 %v504, %v631
        %v633 = vpop.f32.mrf.mxu0
        %v634 = vadd.f32 %v508, %v633
        %635 = vmatprep.mubr.f32.mxu0 0.0
        %636 = vmatmul.mubr.f32.gmra.mxu0 %v461
        %v637 = vpop.f32.mrf.mxu0
        %v638 = vadd.f32 %v504, %v637
        %v639 = vpop.f32.mrf.mxu0
        %v640 = vadd.f32 %v508, %v639
        %641 = vmatprep.mubr.f32.mxu0 0.0
        %642 = vmatmul.mubr.f32.gmra.mxu0 %v462
        %v643 = vpop.f32.mrf.mxu0
        %v644 = vadd.f32 %v504, %v643
        %v645 = vpop.f32.mrf.mxu0
        %v646 = vadd.f32 %v508, %v645
        %647 = vmatprep.mubr.f32.mxu0 0.0
        %648 = vmatmul.mubr.f32.gmra.mxu0 %v463
        %v649 = vpop.f32.mrf.mxu0
        %v650 = vadd.f32 %v504, %v649
        %v651 = vpop.f32.mrf.mxu0
        %v652 = vadd.f32 %v508, %v651
        %653 = vmatprep.mubr.f32.mxu0 0.0
        %654 = vmatmul.mubr.f32.gmra.mxu0 %v464
        %v655 = vpop.f32.mrf.mxu0
        %v656 = vadd.f32 %v504, %v655
        %v657 = vpop.f32.mrf.mxu0
        %v658 = vadd.f32 %v508, %v657
        %659 = vmatprep.mubr.f32.mxu0 0.0
        %660 = vmatmul.mubr.f32.gmra.mxu0 %v465
        %v661 = vpop.f32.mrf.mxu0
        %v662 = vadd.f32 %v504, %v661
        %v663 = vpop.f32.mrf.mxu0
        %v664 = vadd.f32 %v508, %v663
        %665 = vmatprep.mubr.f32.mxu0 0.0
        %666 = vmatmul.mubr.f32.gmra.mxu0 %v466
        %v667 = vpop.f32.mrf.mxu0
        %v668 = vadd.f32 %v504, %v667
        %v669 = vpop.f32.mrf.mxu0
        %v670 = vadd.f32 %v508, %v669
        %671 = vdwg.mxu0
        %v672 = vld [vmem:[%s3] sm:$0x1]
        %v673 = vld [vmem:[%s4] sm:$0x1]
        %674 = vadd.xlane.f32.xlu0 %v578
        %v675 = vpop.xlane.xlu0 %674
        %676 = vadd.xlane.f32.xlu0 %v584
        %v677 = vpop.xlane.xlu0 %676
        %678 = vadd.xlane.f32.xlu0 %v590
        %v679 = vpop.xlane.xlu0 %678
        %680 = vadd.xlane.f32.xlu0 %v596
        %v681 = vpop.xlane.xlu0 %680
        %682 = vadd.xlane.f32.xlu0 %v602
        %v683 = vpop.xlane.xlu0 %682
        %684 = vadd.xlane.f32.xlu0 %v608
        %v685 = vpop.xlane.xlu0 %684
        %686 = vadd.xlane.f32.xlu0 %v614
        %v687 = vpop.xlane.xlu0 %686
        %688 = vadd.xlane.f32.xlu0 %v620
        %v689 = vpop.xlane.xlu0 %688
        %690 = vadd.xlane.f32.xlu0 %v626
        %v691 = vpop.xlane.xlu0 %690
        %692 = vadd.xlane.f32.xlu0 %v632
        %v693 = vpop.xlane.xlu0 %692
        %694 = vadd.xlane.f32.xlu0 %v638
        %v695 = vpop.xlane.xlu0 %694
        %696 = vadd.xlane.f32.xlu0 %v644
        %v697 = vpop.xlane.xlu0 %696
        %698 = vadd.xlane.f32.xlu0 %v650
        %v699 = vpop.xlane.xlu0 %698
        %700 = vadd.xlane.f32.xlu0 %v656
        %v701 = vpop.xlane.xlu0 %700
        %702 = vadd.xlane.f32.xlu0 %v662
        %v703 = vpop.xlane.xlu0 %702
        %704 = vadd.xlane.f32.xlu0 %v668
        %v705 = vpop.xlane.xlu0 %704
        %v706 = vrcp.pop 128.0
        %v707 = vmul.f32 %v675, %v706
        %v708 = vmul.f32 %v677, %v706
        %v709 = vmul.f32 %v679, %v706
        %v710 = vmul.f32 %v681, %v706
        %v711 = vmul.f32 %v683, %v706
        %v712 = vmul.f32 %v685, %v706
        %v713 = vmul.f32 %v687, %v706
        %v714 = vmul.f32 %v689, %v706
        %v715 = vmul.f32 %v691, %v706
        %v716 = vmul.f32 %v693, %v706
        %v717 = vmul.f32 %v695, %v706
        %v718 = vmul.f32 %v697, %v706
        %v719 = vmul.f32 %v699, %v706
        %v720 = vmul.f32 %v701, %v706
        %v721 = vmul.f32 %v703, %v706
        %v722 = vmul.f32 %v705, %v706
        %v723 = vsub.f32 %v578, %v707
        %v724 = vsub.f32 %v584, %v708
        %v725 = vsub.f32 %v590, %v709
        %v726 = vsub.f32 %v596, %v710
        %v727 = vsub.f32 %v602, %v711
        %v728 = vsub.f32 %v608, %v712
        %v729 = vsub.f32 %v614, %v713
        %v730 = vsub.f32 %v620, %v714
        %v731 = vsub.f32 %v626, %v715
        %v732 = vsub.f32 %v632, %v716
        %v733 = vsub.f32 %v638, %v717
        %v734 = vsub.f32 %v644, %v718
        %v735 = vsub.f32 %v650, %v719
        %v736 = vsub.f32 %v656, %v720
        %v737 = vsub.f32 %v662, %v721
        %v738 = vsub.f32 %v668, %v722
        %v739 = vmul.f32 %v723, %v723
        %v740 = vmul.f32 %v724, %v724
        %v741 = vmul.f32 %v725, %v725
        %v742 = vmul.f32 %v726, %v726
        %v743 = vmul.f32 %v727, %v727
        %v744 = vmul.f32 %v728, %v728
        %v745 = vmul.f32 %v729, %v729
        %v746 = vmul.f32 %v730, %v730
        %v747 = vmul.f32 %v731, %v731
        %v748 = vmul.f32 %v732, %v732
        %v749 = vmul.f32 %v733, %v733
        %v750 = vmul.f32 %v734, %v734
        %v751 = vmul.f32 %v735, %v735
        %v752 = vmul.f32 %v736, %v736
        %v753 = vmul.f32 %v737, %v737
        %v754 = vmul.f32 %v738, %v738
        %755 = vadd.xlane.f32.xlu0 %v739
        %v756 = vpop.xlane.xlu0 %755
        %757 = vadd.xlane.f32.xlu0 %v740
        %v758 = vpop.xlane.xlu0 %757
        %759 = vadd.xlane.f32.xlu0 %v741
        %v760 = vpop.xlane.xlu0 %759
        %761 = vadd.xlane.f32.xlu0 %v742
        %v762 = vpop.xlane.xlu0 %761
        %763 = vadd.xlane.f32.xlu0 %v743
        %v764 = vpop.xlane.xlu0 %763
        %765 = vadd.xlane.f32.xlu0 %v744
        %v766 = vpop.xlane.xlu0 %765
        %767 = vadd.xlane.f32.xlu0 %v745
        %v768 = vpop.xlane.xlu0 %767
        %769 = vadd.xlane.f32.xlu0 %v746
        %v770 = vpop.xlane.xlu0 %769
        %771 = vadd.xlane.f32.xlu0 %v747
        %v772 = vpop.xlane.xlu0 %771
        %773 = vadd.xlane.f32.xlu0 %v748
        %v774 = vpop.xlane.xlu0 %773
        %775 = vadd.xlane.f32.xlu0 %v749
        %v776 = vpop.xlane.xlu0 %775
        %777 = vadd.xlane.f32.xlu0 %v750
        %v778 = vpop.xlane.xlu0 %777
        %779 = vadd.xlane.f32.xlu0 %v751
        %v780 = vpop.xlane.xlu0 %779
        %781 = vadd.xlane.f32.xlu0 %v752
        %v782 = vpop.xlane.xlu0 %781
        %783 = vadd.xlane.f32.xlu0 %v753
        %v784 = vpop.xlane.xlu0 %783
        %785 = vadd.xlane.f32.xlu0 %v754
        %v786 = vpop.xlane.xlu0 %785
        %v787 = vmul.f32 %v756, %v706
        %v788 = vmul.f32 %v758, %v706
        %v789 = vmul.f32 %v760, %v706
        %v790 = vmul.f32 %v762, %v706
        %v791 = vmul.f32 %v764, %v706
        %v792 = vmul.f32 %v766, %v706
        %v793 = vmul.f32 %v768, %v706
        %v794 = vmul.f32 %v770, %v706
        %v795 = vmul.f32 %v772, %v706
        %v796 = vmul.f32 %v774, %v706
        %v797 = vmul.f32 %v776, %v706
        %v798 = vmul.f32 %v778, %v706
        %v799 = vmul.f32 %v780, %v706
        %v800 = vmul.f32 %v782, %v706
        %v801 = vmul.f32 %v784, %v706
        %v802 = vmul.f32 %v786, %v706
        %v803 = vadd.f32 %v787, 1e-05
        %v804 = vadd.f32 %v788, 1e-05
        %v805 = vadd.f32 %v789, 1e-05
        %v806 = vadd.f32 %v790, 1e-05
        %v807 = vadd.f32 %v791, 1e-05
        %v808 = vadd.f32 %v792, 1e-05
        %v809 = vadd.f32 %v793, 1e-05
        %v810 = vadd.f32 %v794, 1e-05
        %v811 = vadd.f32 %v795, 1e-05
        %v812 = vadd.f32 %v796, 1e-05
        %v813 = vadd.f32 %v797, 1e-05
        %v814 = vadd.f32 %v798, 1e-05
        %v815 = vadd.f32 %v799, 1e-05
        %v816 = vadd.f32 %v800, 1e-05
        %v817 = vadd.f32 %v801, 1e-05
        %v818 = vadd.f32 %v802, 1e-05
        %v819 = vrsqrt.pop %v803
        %v820 = vrsqrt.pop %v804
        %v821 = vrsqrt.pop %v805
        %v822 = vrsqrt.pop %v806
        %v823 = vrsqrt.pop %v807
        %v824 = vrsqrt.pop %v808
        %v825 = vrsqrt.pop %v809
        %v826 = vrsqrt.pop %v810
        %v827 = vrsqrt.pop %v811
        %v828 = vrsqrt.pop %v812
        %v829 = vrsqrt.pop %v813
        %v830 = vrsqrt.pop %v814
        %v831 = vrsqrt.pop %v815
        %v832 = vrsqrt.pop %v816
        %v833 = vrsqrt.pop %v817
        %v834 = vrsqrt.pop %v818
        %v835 = vmul.f32 %v723, %v819
        %v836 = vmul.f32 %v724, %v820
        %v837 = vmul.f32 %v725, %v821
        %v838 = vmul.f32 %v726, %v822
        %v839 = vmul.f32 %v727, %v823
        %v840 = vmul.f32 %v728, %v824
        %v841 = vmul.f32 %v729, %v825
        %v842 = vmul.f32 %v730, %v826
        %v843 = vmul.f32 %v731, %v827
        %v844 = vmul.f32 %v732, %v828
        %v845 = vmul.f32 %v733, %v829
        %v846 = vmul.f32 %v734, %v830
        %v847 = vmul.f32 %v735, %v831
        %v848 = vmul.f32 %v736, %v832
        %v849 = vmul.f32 %v737, %v833
        %v850 = vmul.f32 %v738, %v834
        %v852 = vlaneseq
        %v853 = vshrl.u32 %v852, 7
        %v854 = vsub.s32 0, %v853
        %v855 = vrot.slane %v672, %v854
        %v857 = vmul.f32 %v835, %v855
        %v858 = vmul.f32 %v836, %v855
        %v859 = vmul.f32 %v837, %v855
        %v860 = vmul.f32 %v838, %v855
        %v861 = vmul.f32 %v839, %v855
        %v862 = vmul.f32 %v840, %v855
        %v863 = vmul.f32 %v841, %v855
        %v864 = vmul.f32 %v842, %v855
        %v865 = vmul.f32 %v843, %v855
        %v866 = vmul.f32 %v844, %v855
        %v867 = vmul.f32 %v845, %v855
        %v868 = vmul.f32 %v846, %v855
        %v869 = vmul.f32 %v847, %v855
        %v870 = vmul.f32 %v848, %v855
        %v871 = vmul.f32 %v849, %v855
        %v872 = vmul.f32 %v850, %v855
        %v874 = vlaneseq
        %v875 = vshrl.u32 %v874, 7
        %v876 = vsub.s32 0, %v875
        %v877 = vrot.slane %v673, %v876
        %v879 = vadd.f32 %v857, %v877
        %v880 = vadd.f32 %v858, %v877
        %v881 = vadd.f32 %v859, %v877
        %v882 = vadd.f32 %v860, %v877
        %v883 = vadd.f32 %v861, %v877
        %v884 = vadd.f32 %v862, %v877
        %v885 = vadd.f32 %v863, %v877
        %v886 = vadd.f32 %v864, %v877
        %v887 = vadd.f32 %v865, %v877
        %v888 = vadd.f32 %v866, %v877
        %v889 = vadd.f32 %v867, %v877
        %v890 = vadd.f32 %v868, %v877
        %v891 = vadd.f32 %v869, %v877
        %v892 = vadd.f32 %v870, %v877
        %v893 = vadd.f32 %v871, %v877
        %v894 = vadd.f32 %v872, %v877
        %v895 = vtanh.pop %v879
        %v896 = vtanh.pop %v880
        %v897 = vtanh.pop %v881
        %v898 = vtanh.pop %v882
        %v899 = vtanh.pop %v883
        %v900 = vtanh.pop %v884
        %v901 = vtanh.pop %v885
        %v902 = vtanh.pop %v886
        %v903 = vtanh.pop %v887
        %v904 = vtanh.pop %v888
        %v905 = vtanh.pop %v889
        %v906 = vtanh.pop %v890
        %v907 = vtanh.pop %v891
        %v908 = vtanh.pop %v892
        %v909 = vtanh.pop %v893
        %v910 = vtanh.pop %v894
        %v911 = vld [vmem:[%s5] sm:$0x1]
        %v912 = vld [vmem:[%s6] sm:$0x1]
        %913 = vadd.xlane.f32.xlu0 %v580
        %v914 = vpop.xlane.xlu0 %913
        %915 = vadd.xlane.f32.xlu0 %v586
        %v916 = vpop.xlane.xlu0 %915
        %917 = vadd.xlane.f32.xlu0 %v592
        %v918 = vpop.xlane.xlu0 %917
        %919 = vadd.xlane.f32.xlu0 %v598
        %v920 = vpop.xlane.xlu0 %919
        %921 = vadd.xlane.f32.xlu0 %v604
        %v922 = vpop.xlane.xlu0 %921
        %923 = vadd.xlane.f32.xlu0 %v610
        %v924 = vpop.xlane.xlu0 %923
        %925 = vadd.xlane.f32.xlu0 %v616
        %v926 = vpop.xlane.xlu0 %925
        %927 = vadd.xlane.f32.xlu0 %v622
        %v928 = vpop.xlane.xlu0 %927
        %929 = vadd.xlane.f32.xlu0 %v628
        %v930 = vpop.xlane.xlu0 %929
        %931 = vadd.xlane.f32.xlu0 %v634
        %v932 = vpop.xlane.xlu0 %931
        %933 = vadd.xlane.f32.xlu0 %v640
        %v934 = vpop.xlane.xlu0 %933
        %935 = vadd.xlane.f32.xlu0 %v646
        %v936 = vpop.xlane.xlu0 %935
        %937 = vadd.xlane.f32.xlu0 %v652
        %v938 = vpop.xlane.xlu0 %937
        %939 = vadd.xlane.f32.xlu0 %v658
        %v940 = vpop.xlane.xlu0 %939
        %941 = vadd.xlane.f32.xlu0 %v664
        %v942 = vpop.xlane.xlu0 %941
        %943 = vadd.xlane.f32.xlu0 %v670
        %v944 = vpop.xlane.xlu0 %943
        %v945 = vmul.f32 %v914, %v706
        %v946 = vmul.f32 %v916, %v706
        %v947 = vmul.f32 %v918, %v706
        %v948 = vmul.f32 %v920, %v706
        %v949 = vmul.f32 %v922, %v706
        %v950 = vmul.f32 %v924, %v706
        %v951 = vmul.f32 %v926, %v706
        %v952 = vmul.f32 %v928, %v706
        %v953 = vmul.f32 %v930, %v706
        %v954 = vmul.f32 %v932, %v706
        %v955 = vmul.f32 %v934, %v706
        %v956 = vmul.f32 %v936, %v706
        %v957 = vmul.f32 %v938, %v706
        %v958 = vmul.f32 %v940, %v706
        %v959 = vmul.f32 %v942, %v706
        %v960 = vmul.f32 %v944, %v706
        %v961 = vsub.f32 %v580, %v945
        %v962 = vsub.f32 %v586, %v946
        %v963 = vsub.f32 %v592, %v947
        %v964 = vsub.f32 %v598, %v948
        %v965 = vsub.f32 %v604, %v949
        %v966 = vsub.f32 %v610, %v950
        %v967 = vsub.f32 %v616, %v951
        %v968 = vsub.f32 %v622, %v952
        %v969 = vsub.f32 %v628, %v953
        %v970 = vsub.f32 %v634, %v954
        %v971 = vsub.f32 %v640, %v955
        %v972 = vsub.f32 %v646, %v956
        %v973 = vsub.f32 %v652, %v957
        %v974 = vsub.f32 %v658, %v958
        %v975 = vsub.f32 %v664, %v959
        %v976 = vsub.f32 %v670, %v960
        %v977 = vmul.f32 %v961, %v961
        %v978 = vmul.f32 %v962, %v962
        %v979 = vmul.f32 %v963, %v963
        %v980 = vmul.f32 %v964, %v964
        %v981 = vmul.f32 %v965, %v965
        %v982 = vmul.f32 %v966, %v966
        %v983 = vmul.f32 %v967, %v967
        %v984 = vmul.f32 %v968, %v968
        %v985 = vmul.f32 %v969, %v969
        %v986 = vmul.f32 %v970, %v970
        %v987 = vmul.f32 %v971, %v971
        %v988 = vmul.f32 %v972, %v972
        %v989 = vmul.f32 %v973, %v973
        %v990 = vmul.f32 %v974, %v974
        %v991 = vmul.f32 %v975, %v975
        %v992 = vmul.f32 %v976, %v976
        %993 = vadd.xlane.f32.xlu0 %v977
        %v994 = vpop.xlane.xlu0 %993
        %995 = vadd.xlane.f32.xlu0 %v978
        %v996 = vpop.xlane.xlu0 %995
        %997 = vadd.xlane.f32.xlu0 %v979
        %v998 = vpop.xlane.xlu0 %997
        %999 = vadd.xlane.f32.xlu0 %v980
        %v1000 = vpop.xlane.xlu0 %999
        %1001 = vadd.xlane.f32.xlu0 %v981
        %v1002 = vpop.xlane.xlu0 %1001
        %1003 = vadd.xlane.f32.xlu0 %v982
        %v1004 = vpop.xlane.xlu0 %1003
        %1005 = vadd.xlane.f32.xlu0 %v983
        %v1006 = vpop.xlane.xlu0 %1005
        %1007 = vadd.xlane.f32.xlu0 %v984
        %v1008 = vpop.xlane.xlu0 %1007
        %1009 = vadd.xlane.f32.xlu0 %v985
        %v1010 = vpop.xlane.xlu0 %1009
        %1011 = vadd.xlane.f32.xlu0 %v986
        %v1012 = vpop.xlane.xlu0 %1011
        %1013 = vadd.xlane.f32.xlu0 %v987
        %v1014 = vpop.xlane.xlu0 %1013
        %1015 = vadd.xlane.f32.xlu0 %v988
        %v1016 = vpop.xlane.xlu0 %1015
        %1017 = vadd.xlane.f32.xlu0 %v989
        %v1018 = vpop.xlane.xlu0 %1017
        %1019 = vadd.xlane.f32.xlu0 %v990
        %v1020 = vpop.xlane.xlu0 %1019
        %1021 = vadd.xlane.f32.xlu0 %v991
        %v1022 = vpop.xlane.xlu0 %1021
        %1023 = vadd.xlane.f32.xlu0 %v992
        %v1024 = vpop.xlane.xlu0 %1023
        %v1025 = vmul.f32 %v994, %v706
        %v1026 = vmul.f32 %v996, %v706
        %v1027 = vmul.f32 %v998, %v706
        %v1028 = vmul.f32 %v1000, %v706
        %v1029 = vmul.f32 %v1002, %v706
        %v1030 = vmul.f32 %v1004, %v706
        %v1031 = vmul.f32 %v1006, %v706
        %v1032 = vmul.f32 %v1008, %v706
        %v1033 = vmul.f32 %v1010, %v706
        %v1034 = vmul.f32 %v1012, %v706
        %v1035 = vmul.f32 %v1014, %v706
        %v1036 = vmul.f32 %v1016, %v706
        %v1037 = vmul.f32 %v1018, %v706
        %v1038 = vmul.f32 %v1020, %v706
        %v1039 = vmul.f32 %v1022, %v706
        %v1040 = vmul.f32 %v1024, %v706
        %v1041 = vadd.f32 %v1025, 1e-05
        %v1042 = vadd.f32 %v1026, 1e-05
        %v1043 = vadd.f32 %v1027, 1e-05
        %v1044 = vadd.f32 %v1028, 1e-05
        %v1045 = vadd.f32 %v1029, 1e-05
        %v1046 = vadd.f32 %v1030, 1e-05
        %v1047 = vadd.f32 %v1031, 1e-05
        %v1048 = vadd.f32 %v1032, 1e-05
        %v1049 = vadd.f32 %v1033, 1e-05
        %v1050 = vadd.f32 %v1034, 1e-05
        %v1051 = vadd.f32 %v1035, 1e-05
        %v1052 = vadd.f32 %v1036, 1e-05
        %v1053 = vadd.f32 %v1037, 1e-05
        %v1054 = vadd.f32 %v1038, 1e-05
        %v1055 = vadd.f32 %v1039, 1e-05
        %v1056 = vadd.f32 %v1040, 1e-05
        %v1057 = vrsqrt.pop %v1041
        %v1058 = vrsqrt.pop %v1042
        %v1059 = vrsqrt.pop %v1043
        %v1060 = vrsqrt.pop %v1044
        %v1061 = vrsqrt.pop %v1045
        %v1062 = vrsqrt.pop %v1046
        %v1063 = vrsqrt.pop %v1047
        %v1064 = vrsqrt.pop %v1048
        %v1065 = vrsqrt.pop %v1049
        %v1066 = vrsqrt.pop %v1050
        %v1067 = vrsqrt.pop %v1051
        %v1068 = vrsqrt.pop %v1052
        %v1069 = vrsqrt.pop %v1053
        %v1070 = vrsqrt.pop %v1054
        %v1071 = vrsqrt.pop %v1055
        %v1072 = vrsqrt.pop %v1056
        %v1073 = vmul.f32 %v961, %v1057
        %v1074 = vmul.f32 %v962, %v1058
        %v1075 = vmul.f32 %v963, %v1059
        %v1076 = vmul.f32 %v964, %v1060
        %v1077 = vmul.f32 %v965, %v1061
        %v1078 = vmul.f32 %v966, %v1062
        %v1079 = vmul.f32 %v967, %v1063
        %v1080 = vmul.f32 %v968, %v1064
        %v1081 = vmul.f32 %v969, %v1065
        %v1082 = vmul.f32 %v970, %v1066
        %v1083 = vmul.f32 %v971, %v1067
        %v1084 = vmul.f32 %v972, %v1068
        %v1085 = vmul.f32 %v973, %v1069
        %v1086 = vmul.f32 %v974, %v1070
        %v1087 = vmul.f32 %v975, %v1071
        %v1088 = vmul.f32 %v976, %v1072
        %v1090 = vlaneseq
        %v1091 = vshrl.u32 %v1090, 7
        %v1092 = vsub.s32 0, %v1091
        %v1093 = vrot.slane %v911, %v1092
        %v1095 = vmul.f32 %v1073, %v1093
        %v1096 = vmul.f32 %v1074, %v1093
        %v1097 = vmul.f32 %v1075, %v1093
        %v1098 = vmul.f32 %v1076, %v1093
        %v1099 = vmul.f32 %v1077, %v1093
        %v1100 = vmul.f32 %v1078, %v1093
        %v1101 = vmul.f32 %v1079, %v1093
        %v1102 = vmul.f32 %v1080, %v1093
        %v1103 = vmul.f32 %v1081, %v1093
        %v1104 = vmul.f32 %v1082, %v1093
        %v1105 = vmul.f32 %v1083, %v1093
        %v1106 = vmul.f32 %v1084, %v1093
        %v1107 = vmul.f32 %v1085, %v1093
        %v1108 = vmul.f32 %v1086, %v1093
        %v1109 = vmul.f32 %v1087, %v1093
        %v1110 = vmul.f32 %v1088, %v1093
        %v1112 = vlaneseq
        %v1113 = vshrl.u32 %v1112, 7
        %v1114 = vsub.s32 0, %v1113
        %v1115 = vrot.slane %v912, %v1114
        %v1117 = vadd.f32 %v1095, %v1115
        %v1118 = vadd.f32 %v1096, %v1115
        %v1119 = vadd.f32 %v1097, %v1115
        %v1120 = vadd.f32 %v1098, %v1115
        %v1121 = vadd.f32 %v1099, %v1115
        %v1122 = vadd.f32 %v1100, %v1115
        %v1123 = vadd.f32 %v1101, %v1115
        %v1124 = vadd.f32 %v1102, %v1115
        %v1125 = vadd.f32 %v1103, %v1115
        %v1126 = vadd.f32 %v1104, %v1115
        %v1127 = vadd.f32 %v1105, %v1115
        %v1128 = vadd.f32 %v1106, %v1115
        %v1129 = vadd.f32 %v1107, %v1115
        %v1130 = vadd.f32 %v1108, %v1115
        %v1131 = vadd.f32 %v1109, %v1115
        %v1132 = vadd.f32 %v1110, %v1115
        %v1133 = vtanh.pop %v1117
        %v1134 = vtanh.pop %v1118
        %v1135 = vtanh.pop %v1119
        %v1136 = vtanh.pop %v1120
        %v1137 = vtanh.pop %v1121
        %v1138 = vtanh.pop %v1122
        %v1139 = vtanh.pop %v1123
        %v1140 = vtanh.pop %v1124
        %v1141 = vtanh.pop %v1125
        %v1142 = vtanh.pop %v1126
        %v1143 = vtanh.pop %v1127
        %v1144 = vtanh.pop %v1128
        %v1145 = vtanh.pop %v1129
        %v1146 = vtanh.pop %v1130
        %v1147 = vtanh.pop %v1131
        %v1148 = vtanh.pop %v1132
        %v1149 = vld [vmem:[#allocation7] sm:$0xff]
        %v1150 = vld [vmem:[#allocation7 + $0x8] sm:$0xff]
        %v1151 = vld [vmem:[#allocation7 + $0x10] sm:$0xff]
        %v1152 = vld [vmem:[#allocation7 + $0x18] sm:$0xff]
        %v1153 = vld [vmem:[#allocation7 + $0x20] sm:$0xff]
        %v1154 = vld [vmem:[#allocation7 + $0x28] sm:$0xff]
        %v1155 = vld [vmem:[#allocation7 + $0x30] sm:$0xff]
        %v1156 = vld [vmem:[#allocation7 + $0x38] sm:$0xff]
        %v1157 = vld [vmem:[#allocation7 + $0x40] sm:$0xff]
        %v1158 = vld [vmem:[#allocation7 + $0x48] sm:$0xff]
        %v1159 = vld [vmem:[#allocation7 + $0x50] sm:$0xff]
        %v1160 = vld [vmem:[#allocation7 + $0x58] sm:$0xff]
        %v1161 = vld [vmem:[#allocation7 + $0x60] sm:$0xff]
        %v1162 = vld [vmem:[#allocation7 + $0x68] sm:$0xff]
        %v1163 = vld [vmem:[#allocation7 + $0x70] sm:$0xff]
        %v1164 = vld [vmem:[#allocation7 + $0x78] sm:$0xff]
        %v1165 = vld [vmem:[#allocation7 + $0x80] sm:$0xff]
        %v1166 = vld [vmem:[#allocation7 + $0x88] sm:$0xff]
        %v1167 = vld [vmem:[#allocation7 + $0x90] sm:$0xff]
        %v1168 = vld [vmem:[#allocation7 + $0x98] sm:$0xff]
        %v1169 = vld [vmem:[#allocation7 + $0xa0] sm:$0xff]
        %v1170 = vld [vmem:[#allocation7 + $0xa8] sm:$0xff]
        %v1171 = vld [vmem:[#allocation7 + $0xb0] sm:$0xff]
        %v1172 = vld [vmem:[#allocation7 + $0xb8] sm:$0xff]
        %v1173 = vld [vmem:[#allocation7 + $0xc0] sm:$0xff]
        %v1174 = vld [vmem:[#allocation7 + $0xc8] sm:$0xff]
        %v1175 = vld [vmem:[#allocation7 + $0xd0] sm:$0xff]
        %v1176 = vld [vmem:[#allocation7 + $0xd8] sm:$0xff]
        %v1177 = vld [vmem:[#allocation7 + $0xe0] sm:$0xff]
        %v1178 = vld [vmem:[#allocation7 + $0xe8] sm:$0xff]
        %v1179 = vld [vmem:[#allocation7 + $0xf0] sm:$0xff]
        %v1180 = vld [vmem:[#allocation7 + $0xf8] sm:$0xff]
        %v1181 = vld [vmem:[#allocation7 + $0x100] sm:$0xff]
        %v1182 = vld [vmem:[#allocation7 + $0x108] sm:$0xff]
        %v1183 = vld [vmem:[#allocation7 + $0x110] sm:$0xff]
        %v1184 = vld [vmem:[#allocation7 + $0x118] sm:$0xff]
        %v1185 = vld [vmem:[#allocation7 + $0x120] sm:$0xff]
        %v1186 = vld [vmem:[#allocation7 + $0x128] sm:$0xff]
        %v1187 = vld [vmem:[#allocation7 + $0x130] sm:$0xff]
        %v1188 = vld [vmem:[#allocation7 + $0x138] sm:$0xff]
        %v1189 = vld [vmem:[#allocation7 + $0x140] sm:$0xff]
        %v1190 = vld [vmem:[#allocation7 + $0x148] sm:$0xff]
        %v1191 = vld [vmem:[#allocation7 + $0x150] sm:$0xff]
        %v1192 = vld [vmem:[#allocation7 + $0x158] sm:$0xff]
        %v1193 = vld [vmem:[#allocation7 + $0x160] sm:$0xff]
        %v1194 = vld [vmem:[#allocation7 + $0x168] sm:$0xff]
        %v1195 = vld [vmem:[#allocation7 + $0x170] sm:$0xff]
        %v1196 = vld [vmem:[#allocation7 + $0x178] sm:$0xff]
        %v1197 = vld [vmem:[#allocation7 + $0x180] sm:$0xff]
        %v1198 = vld [vmem:[#allocation7 + $0x188] sm:$0xff]
        %v1199 = vld [vmem:[#allocation7 + $0x190] sm:$0xff]
        %v1200 = vld [vmem:[#allocation7 + $0x198] sm:$0xff]
        %v1201 = vld [vmem:[#allocation7 + $0x1a0] sm:$0xff]
        %v1202 = vld [vmem:[#allocation7 + $0x1a8] sm:$0xff]
        %v1203 = vld [vmem:[#allocation7 + $0x1b0] sm:$0xff]
        %v1204 = vld [vmem:[#allocation7 + $0x1b8] sm:$0xff]
        %v1205 = vld [vmem:[#allocation7 + $0x1c0] sm:$0xff]
        %v1206 = vld [vmem:[#allocation7 + $0x1c8] sm:$0xff]
        %v1207 = vld [vmem:[#allocation7 + $0x1d0] sm:$0xff]
        %v1208 = vld [vmem:[#allocation7 + $0x1d8] sm:$0xff]
        %v1209 = vld [vmem:[#allocation7 + $0x1e0] sm:$0xff]
        %v1210 = vld [vmem:[#allocation7 + $0x1e8] sm:$0xff]
        %v1211 = vld [vmem:[#allocation7 + $0x1f0] sm:$0xff]
        %v1212 = vld [vmem:[#allocation7 + $0x1f8] sm:$0xff]
        %v1213 = vld [vmem:[%s8] sm:$0x3]
        %v1215 = vlaneseq
        %v1216 = vshrl.u32 %v1215, 7
        %v1217 = vsub.s32 0, %v1216
        %v1218 = vrot.slane %v1213, %v1217
        %v1219 = vlaneseq
        %v1220 = vshrl.u32 %v1219, 7
        %v1221 = vsub.s32 1, %v1220
        %v1222 = vrot.slane %v1213, %v1221
        %1225 = vmatprep.subr.mxu0 %v1180
        %1226 = vmatpush1.msra.mxu0 %v1179
        %1227 = vmatprep.subr.mxu0 %v1178
        %1228 = vmatpush1.msra.mxu0 %v1177
        %1229 = vmatprep.subr.mxu0 %v1176
        %1230 = vmatpush1.msra.mxu0 %v1175
        %1231 = vmatprep.subr.mxu0 %v1174
        %1232 = vmatpush1.msra.mxu0 %v1173
        %1233 = vmatprep.subr.mxu0 %v1172
        %1234 = vmatpush1.msra.mxu0 %v1171
        %1235 = vmatprep.subr.mxu0 %v1170
        %1236 = vmatpush1.msra.mxu0 %v1169
        %1237 = vmatprep.subr.mxu0 %v1168
        %1238 = vmatpush1.msra.mxu0 %v1167
        %1239 = vmatprep.subr.mxu0 %v1166
        %1240 = vmatpush1.msra.mxu0 %v1165
        %1241 = vmatprep.subr.mxu0 %v1164
        %1242 = vmatpush1.msra.mxu0 %v1163
        %1243 = vmatprep.subr.mxu0 %v1162
        %1244 = vmatpush1.msra.mxu0 %v1161
        %1245 = vmatprep.subr.mxu0 %v1160
        %1246 = vmatpush1.msra.mxu0 %v1159
        %1247 = vmatprep.subr.mxu0 %v1158
        %1248 = vmatpush1.msra.mxu0 %v1157
        %1249 = vmatprep.subr.mxu0 %v1156
        %1250 = vmatpush1.msra.mxu0 %v1155
        %1251 = vmatprep.subr.mxu0 %v1154
        %1252 = vmatpush1.msra.mxu0 %v1153
        %1253 = vmatprep.subr.mxu0 %v1152
        %1254 = vmatpush1.msra.mxu0 %v1151
        %1255 = vmatprep.subr.mxu0 %v1150
        %1256 = vmatpush1.msra.mxu0 %v1149
        %1257 = vmatprep.subr.mxu0 %v1212
        %1258 = vmatpush2.msra.mxu0 %v1211
        %1259 = vmatprep.subr.mxu0 %v1210
        %1260 = vmatpush2.msra.mxu0 %v1209
        %1261 = vmatprep.subr.mxu0 %v1208
        %1262 = vmatpush2.msra.mxu0 %v1207
        %1263 = vmatprep.subr.mxu0 %v1206
        %1264 = vmatpush2.msra.mxu0 %v1205
        %1265 = vmatprep.subr.mxu0 %v1204
        %1266 = vmatpush2.msra.mxu0 %v1203
        %1267 = vmatprep.subr.mxu0 %v1202
        %1268 = vmatpush2.msra.mxu0 %v1201
        %1269 = vmatprep.subr.mxu0 %v1200
        %1270 = vmatpush2.msra.mxu0 %v1199
        %1271 = vmatprep.subr.mxu0 %v1198
        %1272 = vmatpush2.msra.mxu0 %v1197
        %1273 = vmatprep.subr.mxu0 %v1196
        %1274 = vmatpush2.msra.mxu0 %v1195
        %1275 = vmatprep.subr.mxu0 %v1194
        %1276 = vmatpush2.msra.mxu0 %v1193
        %1277 = vmatprep.subr.mxu0 %v1192
        %1278 = vmatpush2.msra.mxu0 %v1191
        %1279 = vmatprep.subr.mxu0 %v1190
        %1280 = vmatpush2.msra.mxu0 %v1189
        %1281 = vmatprep.subr.mxu0 %v1188
        %1282 = vmatpush2.msra.mxu0 %v1187
        %1283 = vmatprep.subr.mxu0 %v1186
        %1284 = vmatpush2.msra.mxu0 %v1185
        %1285 = vmatprep.subr.mxu0 %v1184
        %1286 = vmatpush2.msra.mxu0 %v1183
        %1287 = vmatprep.subr.mxu0 %v1182
        %1288 = vmatpush2.msra.mxu0 %v1181
        %1289 = vmatprep.mubr.f32.mxu0 %v1133
        %1290 = vmatmul.mubr.f32.gmra.mxu0 %v895
        %v1291 = vpop.f32.mrf.mxu0
        %v1292 = vadd.f32 %v1218, %v1291
        %v1293 = vpop.f32.mrf.mxu0
        %v1294 = vadd.f32 %v1222, %v1293
        %1295 = vmatprep.mubr.f32.mxu0 %v1134
        %1296 = vmatmul.mubr.f32.gmra.mxu0 %v896
        %v1297 = vpop.f32.mrf.mxu0
        %v1298 = vadd.f32 %v1218, %v1297
        %v1299 = vpop.f32.mrf.mxu0
        %v1300 = vadd.f32 %v1222, %v1299
        %1301 = vmatprep.mubr.f32.mxu0 %v1135
        %1302 = vmatmul.mubr.f32.gmra.mxu0 %v897
        %v1303 = vpop.f32.mrf.mxu0
        %v1304 = vadd.f32 %v1218, %v1303
        %v1305 = vpop.f32.mrf.mxu0
        %v1306 = vadd.f32 %v1222, %v1305
        %1307 = vmatprep.mubr.f32.mxu0 %v1136
        %1308 = vmatmul.mubr.f32.gmra.mxu0 %v898
        %v1309 = vpop.f32.mrf.mxu0
        %v1310 = vadd.f32 %v1218, %v1309
        %v1311 = vpop.f32.mrf.mxu0
        %v1312 = vadd.f32 %v1222, %v1311
        %1313 = vmatprep.mubr.f32.mxu0 %v1137
        %1314 = vmatmul.mubr.f32.gmra.mxu0 %v899
        %v1315 = vpop.f32.mrf.mxu0
        %v1316 = vadd.f32 %v1218, %v1315
        %v1317 = vpop.f32.mrf.mxu0
        %v1318 = vadd.f32 %v1222, %v1317
        %1319 = vmatprep.mubr.f32.mxu0 %v1138
        %1320 = vmatmul.mubr.f32.gmra.mxu0 %v900
        %v1321 = vpop.f32.mrf.mxu0
        %v1322 = vadd.f32 %v1218, %v1321
        %v1323 = vpop.f32.mrf.mxu0
        %v1324 = vadd.f32 %v1222, %v1323
        %1325 = vmatprep.mubr.f32.mxu0 %v1139
        %1326 = vmatmul.mubr.f32.gmra.mxu0 %v901
        %v1327 = vpop.f32.mrf.mxu0
        %v1328 = vadd.f32 %v1218, %v1327
        %v1329 = vpop.f32.mrf.mxu0
        %v1330 = vadd.f32 %v1222, %v1329
        %1331 = vmatprep.mubr.f32.mxu0 %v1140
        %1332 = vmatmul.mubr.f32.gmra.mxu0 %v902
        %v1333 = vpop.f32.mrf.mxu0
        %v1334 = vadd.f32 %v1218, %v1333
        %v1335 = vpop.f32.mrf.mxu0
        %v1336 = vadd.f32 %v1222, %v1335
        %1337 = vmatprep.mubr.f32.mxu0 %v1141
        %1338 = vmatmul.mubr.f32.gmra.mxu0 %v903
        %v1339 = vpop.f32.mrf.mxu0
        %v1340 = vadd.f32 %v1218, %v1339
        %v1341 = vpop.f32.mrf.mxu0
        %v1342 = vadd.f32 %v1222, %v1341
        %1343 = vmatprep.mubr.f32.mxu0 %v1142
        %1344 = vmatmul.mubr.f32.gmra.mxu0 %v904
        %v1345 = vpop.f32.mrf.mxu0
        %v1346 = vadd.f32 %v1218, %v1345
        %v1347 = vpop.f32.mrf.mxu0
        %v1348 = vadd.f32 %v1222, %v1347
        %1349 = vmatprep.mubr.f32.mxu0 %v1143
        %1350 = vmatmul.mubr.f32.gmra.mxu0 %v905
        %v1351 = vpop.f32.mrf.mxu0
        %v1352 = vadd.f32 %v1218, %v1351
        %v1353 = vpop.f32.mrf.mxu0
        %v1354 = vadd.f32 %v1222, %v1353
        %1355 = vmatprep.mubr.f32.mxu0 %v1144
        %1356 = vmatmul.mubr.f32.gmra.mxu0 %v906
        %v1357 = vpop.f32.mrf.mxu0
        %v1358 = vadd.f32 %v1218, %v1357
        %v1359 = vpop.f32.mrf.mxu0
        %v1360 = vadd.f32 %v1222, %v1359
        %1361 = vmatprep.mubr.f32.mxu0 %v1145
        %1362 = vmatmul.mubr.f32.gmra.mxu0 %v907
        %v1363 = vpop.f32.mrf.mxu0
        %v1364 = vadd.f32 %v1218, %v1363
        %v1365 = vpop.f32.mrf.mxu0
        %v1366 = vadd.f32 %v1222, %v1365
        %1367 = vmatprep.mubr.f32.mxu0 %v1146
        %1368 = vmatmul.mubr.f32.gmra.mxu0 %v908
        %v1369 = vpop.f32.mrf.mxu0
        %v1370 = vadd.f32 %v1218, %v1369
        %v1371 = vpop.f32.mrf.mxu0
        %v1372 = vadd.f32 %v1222, %v1371
        %1373 = vmatprep.mubr.f32.mxu0 %v1147
        %1374 = vmatmul.mubr.f32.gmra.mxu0 %v909
        %v1375 = vpop.f32.mrf.mxu0
        %v1376 = vadd.f32 %v1218, %v1375
        %v1377 = vpop.f32.mrf.mxu0
        %v1378 = vadd.f32 %v1222, %v1377
        %1379 = vmatprep.mubr.f32.mxu0 %v1148
        %1380 = vmatmul.mubr.f32.gmra.mxu0 %v910
        %v1381 = vpop.f32.mrf.mxu0
        %v1382 = vadd.f32 %v1218, %v1381
        %v1383 = vpop.f32.mrf.mxu0
        %v1384 = vadd.f32 %v1222, %v1383
        %1385 = vdwg.mxu0
        %v1386 = vmax.f32 %v1292, 0.0
        %v1387 = vmax.f32 %v1294, 0.0
        %v1388 = vmax.f32 %v1298, 0.0
        %v1389 = vmax.f32 %v1300, 0.0
        %v1390 = vmax.f32 %v1304, 0.0
        %v1391 = vmax.f32 %v1306, 0.0
        %v1392 = vmax.f32 %v1310, 0.0
        %v1393 = vmax.f32 %v1312, 0.0
        %v1394 = vmax.f32 %v1316, 0.0
        %v1395 = vmax.f32 %v1318, 0.0
        %v1396 = vmax.f32 %v1322, 0.0
        %v1397 = vmax.f32 %v1324, 0.0
        %v1398 = vmax.f32 %v1328, 0.0
        %v1399 = vmax.f32 %v1330, 0.0
        %v1400 = vmax.f32 %v1334, 0.0
        %v1401 = vmax.f32 %v1336, 0.0
        %v1402 = vmax.f32 %v1340, 0.0
        %v1403 = vmax.f32 %v1342, 0.0
        %v1404 = vmax.f32 %v1346, 0.0
        %v1405 = vmax.f32 %v1348, 0.0
        %v1406 = vmax.f32 %v1352, 0.0
        %v1407 = vmax.f32 %v1354, 0.0
        %v1408 = vmax.f32 %v1358, 0.0
        %v1409 = vmax.f32 %v1360, 0.0
        %v1410 = vmax.f32 %v1364, 0.0
        %v1411 = vmax.f32 %v1366, 0.0
        %v1412 = vmax.f32 %v1370, 0.0
        %v1413 = vmax.f32 %v1372, 0.0
        %v1414 = vmax.f32 %v1376, 0.0
        %v1415 = vmax.f32 %v1378, 0.0
        %v1416 = vmax.f32 %v1382, 0.0
        %v1417 = vmax.f32 %v1384, 0.0
        %v1418 = vld [vmem:[#allocation8] sm:$0xff]
        %v1419 = vld [vmem:[#allocation8 + $0x8] sm:$0xff]
        %v1420 = vld [vmem:[#allocation8 + $0x10] sm:$0xff]
        %v1421 = vld [vmem:[#allocation8 + $0x18] sm:$0xff]
        %v1422 = vld [vmem:[#allocation8 + $0x20] sm:$0xff]
        %v1423 = vld [vmem:[#allocation8 + $0x28] sm:$0xff]
        %v1424 = vld [vmem:[#allocation8 + $0x30] sm:$0xff]
        %v1425 = vld [vmem:[#allocation8 + $0x38] sm:$0xff]
        %v1426 = vld [vmem:[#allocation8 + $0x40] sm:$0xff]
        %v1427 = vld [vmem:[#allocation8 + $0x48] sm:$0xff]
        %v1428 = vld [vmem:[#allocation8 + $0x50] sm:$0xff]
        %v1429 = vld [vmem:[#allocation8 + $0x58] sm:$0xff]
        %v1430 = vld [vmem:[#allocation8 + $0x60] sm:$0xff]
        %v1431 = vld [vmem:[#allocation8 + $0x68] sm:$0xff]
        %v1432 = vld [vmem:[#allocation8 + $0x70] sm:$0xff]
        %v1433 = vld [vmem:[#allocation8 + $0x78] sm:$0xff]
        %v1434 = vld [vmem:[#allocation8 + $0x80] sm:$0xff]
        %v1435 = vld [vmem:[#allocation8 + $0x88] sm:$0xff]
        %v1436 = vld [vmem:[#allocation8 + $0x90] sm:$0xff]
        %v1437 = vld [vmem:[#allocation8 + $0x98] sm:$0xff]
        %v1438 = vld [vmem:[#allocation8 + $0xa0] sm:$0xff]
        %v1439 = vld [vmem:[#allocation8 + $0xa8] sm:$0xff]
        %v1440 = vld [vmem:[#allocation8 + $0xb0] sm:$0xff]
        %v1441 = vld [vmem:[#allocation8 + $0xb8] sm:$0xff]
        %v1442 = vld [vmem:[#allocation8 + $0xc0] sm:$0xff]
        %v1443 = vld [vmem:[#allocation8 + $0xc8] sm:$0xff]
        %v1444 = vld [vmem:[#allocation8 + $0xd0] sm:$0xff]
        %v1445 = vld [vmem:[#allocation8 + $0xd8] sm:$0xff]
        %v1446 = vld [vmem:[#allocation8 + $0xe0] sm:$0xff]
        %v1447 = vld [vmem:[#allocation8 + $0xe8] sm:$0xff]
        %v1448 = vld [vmem:[#allocation8 + $0xf0] sm:$0xff]
        %v1449 = vld [vmem:[#allocation8 + $0xf8] sm:$0xff]
        %v1450 = vld [vmem:[%s10] sm:$0x1]
        %v1452 = vlaneseq
        %v1453 = vshrl.u32 %v1452, 7
        %v1454 = vsub.s32 0, %v1453
        %v1455 = vrot.slane %v1450, %v1454
        %1457 = vmatprep.subr.mxu0 0.0
        %1458 = vmatpush1.msra.mxu0 %v1433
        %1459 = vmatprep.subr.mxu0 0.0
        %1460 = vmatpush1.msra.mxu0 %v1432
        %1461 = vmatprep.subr.mxu0 0.0
        %1462 = vmatpush1.msra.mxu0 %v1431
        %1463 = vmatprep.subr.mxu0 0.0
        %1464 = vmatpush1.msra.mxu0 %v1430
        %1465 = vmatprep.subr.mxu0 0.0
        %1466 = vmatpush1.msra.mxu0 %v1429
        %1467 = vmatprep.subr.mxu0 0.0
        %1468 = vmatpush1.msra.mxu0 %v1428
        %1469 = vmatprep.subr.mxu0 0.0
        %1470 = vmatpush1.msra.mxu0 %v1427
        %1471 = vmatprep.subr.mxu0 0.0
        %1472 = vmatpush1.msra.mxu0 %v1426
        %1473 = vmatprep.subr.mxu0 0.0
        %1474 = vmatpush1.msra.mxu0 %v1425
        %1475 = vmatprep.subr.mxu0 0.0
        %1476 = vmatpush1.msra.mxu0 %v1424
        %1477 = vmatprep.subr.mxu0 0.0
        %1478 = vmatpush1.msra.mxu0 %v1423
        %1479 = vmatprep.subr.mxu0 0.0
        %1480 = vmatpush1.msra.mxu0 %v1422
        %1481 = vmatprep.subr.mxu0 0.0
        %1482 = vmatpush1.msra.mxu0 %v1421
        %1483 = vmatprep.subr.mxu0 0.0
        %1484 = vmatpush1.msra.mxu0 %v1420
        %1485 = vmatprep.subr.mxu0 0.0
        %1486 = vmatpush1.msra.mxu0 %v1419
        %1487 = vmatprep.subr.mxu0 0.0
        %1488 = vmatpush1.msra.mxu0 %v1418
        %1489 = vmatprep.subr.mxu0 0.0
        %1490 = vmatpush2.msra.mxu0 %v1449
        %1491 = vmatprep.subr.mxu0 0.0
        %1492 = vmatpush2.msra.mxu0 %v1448
        %1493 = vmatprep.subr.mxu0 0.0
        %1494 = vmatpush2.msra.mxu0 %v1447
        %1495 = vmatprep.subr.mxu0 0.0
        %1496 = vmatpush2.msra.mxu0 %v1446
        %1497 = vmatprep.subr.mxu0 0.0
        %1498 = vmatpush2.msra.mxu0 %v1445
        %1499 = vmatprep.subr.mxu0 0.0
        %1500 = vmatpush2.msra.mxu0 %v1444
        %1501 = vmatprep.subr.mxu0 0.0
        %1502 = vmatpush2.msra.mxu0 %v1443
        %1503 = vmatprep.subr.mxu0 0.0
        %1504 = vmatpush2.msra.mxu0 %v1442
        %1505 = vmatprep.subr.mxu0 0.0
        %1506 = vmatpush2.msra.mxu0 %v1441
        %1507 = vmatprep.subr.mxu0 0.0
        %1508 = vmatpush2.msra.mxu0 %v1440
        %1509 = vmatprep.subr.mxu0 0.0
        %1510 = vmatpush2.msra.mxu0 %v1439
        %1511 = vmatprep.subr.mxu0 0.0
        %1512 = vmatpush2.msra.mxu0 %v1438
        %1513 = vmatprep.subr.mxu0 0.0
        %1514 = vmatpush2.msra.mxu0 %v1437
        %1515 = vmatprep.subr.mxu0 0.0
        %1516 = vmatpush2.msra.mxu0 %v1436
        %1517 = vmatprep.subr.mxu0 0.0
        %1518 = vmatpush2.msra.mxu0 %v1435
        %1519 = vmatprep.subr.mxu0 0.0
        %1520 = vmatpush2.msra.mxu0 %v1434
        %1521 = vmatprep.mubr.f32.mxu0 %v1387
        %1522 = vmatmul.mubr.f32.gmra.mxu0 %v1386
        %v1523 = vpop.f32.mrf.mxu0
        %v1524 = vadd.f32 %v1455, %v1523
        %v1525 = vpop.f32.mrf.mxu0
        %1526 = vmatprep.mubr.f32.mxu0 %v1389
        %1527 = vmatmul.mubr.f32.gmra.mxu0 %v1388
        %v1528 = vpop.f32.mrf.mxu0
        %v1529 = vadd.f32 %v1455, %v1528
        %v1530 = vpop.f32.mrf.mxu0
        %1531 = vmatprep.mubr.f32.mxu0 %v1391
        %1532 = vmatmul.mubr.f32.gmra.mxu0 %v1390
        %v1533 = vpop.f32.mrf.mxu0
        %v1534 = vadd.f32 %v1455, %v1533
        %v1535 = vpop.f32.mrf.mxu0
        %1536 = vmatprep.mubr.f32.mxu0 %v1393
        %1537 = vmatmul.mubr.f32.gmra.mxu0 %v1392
        %v1538 = vpop.f32.mrf.mxu0
        %v1539 = vadd.f32 %v1455, %v1538
        %v1540 = vpop.f32.mrf.mxu0
        %1541 = vmatprep.mubr.f32.mxu0 %v1395
        %1542 = vmatmul.mubr.f32.gmra.mxu0 %v1394
        %v1543 = vpop.f32.mrf.mxu0
        %v1544 = vadd.f32 %v1455, %v1543
        %v1545 = vpop.f32.mrf.mxu0
        %1546 = vmatprep.mubr.f32.mxu0 %v1397
        %1547 = vmatmul.mubr.f32.gmra.mxu0 %v1396
        %v1548 = vpop.f32.mrf.mxu0
        %v1549 = vadd.f32 %v1455, %v1548
        %v1550 = vpop.f32.mrf.mxu0
        %1551 = vmatprep.mubr.f32.mxu0 %v1399
        %1552 = vmatmul.mubr.f32.gmra.mxu0 %v1398
        %v1553 = vpop.f32.mrf.mxu0
        %v1554 = vadd.f32 %v1455, %v1553
        %v1555 = vpop.f32.mrf.mxu0
        %1556 = vmatprep.mubr.f32.mxu0 %v1401
        %1557 = vmatmul.mubr.f32.gmra.mxu0 %v1400
        %v1558 = vpop.f32.mrf.mxu0
        %v1559 = vadd.f32 %v1455, %v1558
        %v1560 = vpop.f32.mrf.mxu0
        %1561 = vmatprep.mubr.f32.mxu0 %v1403
        %1562 = vmatmul.mubr.f32.gmra.mxu0 %v1402
        %v1563 = vpop.f32.mrf.mxu0
        %v1564 = vadd.f32 %v1455, %v1563
        %v1565 = vpop.f32.mrf.mxu0
        %1566 = vmatprep.mubr.f32.mxu0 %v1405
        %1567 = vmatmul.mubr.f32.gmra.mxu0 %v1404
        %v1568 = vpop.f32.mrf.mxu0
        %v1569 = vadd.f32 %v1455, %v1568
        %v1570 = vpop.f32.mrf.mxu0
        %1571 = vmatprep.mubr.f32.mxu0 %v1407
        %1572 = vmatmul.mubr.f32.gmra.mxu0 %v1406
        %v1573 = vpop.f32.mrf.mxu0
        %v1574 = vadd.f32 %v1455, %v1573
        %v1575 = vpop.f32.mrf.mxu0
        %1576 = vmatprep.mubr.f32.mxu0 %v1409
        %1577 = vmatmul.mubr.f32.gmra.mxu0 %v1408
        %v1578 = vpop.f32.mrf.mxu0
        %v1579 = vadd.f32 %v1455, %v1578
        %v1580 = vpop.f32.mrf.mxu0
        %1581 = vmatprep.mubr.f32.mxu0 %v1411
        %1582 = vmatmul.mubr.f32.gmra.mxu0 %v1410
        %v1583 = vpop.f32.mrf.mxu0
        %v1584 = vadd.f32 %v1455, %v1583
        %v1585 = vpop.f32.mrf.mxu0
        %1586 = vmatprep.mubr.f32.mxu0 %v1413
        %1587 = vmatmul.mubr.f32.gmra.mxu0 %v1412
        %v1588 = vpop.f32.mrf.mxu0
        %v1589 = vadd.f32 %v1455, %v1588
        %v1590 = vpop.f32.mrf.mxu0
        %1591 = vmatprep.mubr.f32.mxu0 %v1415
        %1592 = vmatmul.mubr.f32.gmra.mxu0 %v1414
        %v1593 = vpop.f32.mrf.mxu0
        %v1594 = vadd.f32 %v1455, %v1593
        %v1595 = vpop.f32.mrf.mxu0
        %1596 = vmatprep.mubr.f32.mxu0 %v1417
        %1597 = vmatmul.mubr.f32.gmra.mxu0 %v1416
        %v1598 = vpop.f32.mrf.mxu0
        %v1599 = vadd.f32 %v1455, %v1598
        %v1600 = vpop.f32.mrf.mxu0
        %1601 = vdwg.mxu0
        %1602 = vst [vmem:[%s448] sm:$0xff] %v1524
        %1603 = vst [vmem:[%s448 + $0x8] sm:$0xff] %v1529
        %1604 = vst [vmem:[%s448 + $0x10] sm:$0xff] %v1534
        %1605 = vst [vmem:[%s448 + $0x18] sm:$0xff] %v1539
        %1606 = vst [vmem:[%s448 + $0x20] sm:$0xff] %v1544
        %1607 = vst [vmem:[%s448 + $0x28] sm:$0xff] %v1549
        %1608 = vst [vmem:[%s448 + $0x30] sm:$0xff] %v1554
        %1609 = vst [vmem:[%s448 + $0x38] sm:$0xff] %v1559
        %1610 = vst [vmem:[%s448 + $0x40] sm:$0xff] %v1564
        %1611 = vst [vmem:[%s448 + $0x48] sm:$0xff] %v1569
        %1612 = vst [vmem:[%s448 + $0x50] sm:$0xff] %v1574
        %1613 = vst [vmem:[%s448 + $0x58] sm:$0xff] %v1579
        %1614 = vst [vmem:[%s448 + $0x60] sm:$0xff] %v1584
        %1615 = vst [vmem:[%s448 + $0x68] sm:$0xff] %v1589
        %1616 = vst [vmem:[%s448 + $0x70] sm:$0xff] %v1594
        %1617 = vst [vmem:[%s448 + $0x78] sm:$0xff] %v1599
        %s1618 = sand.u32 %s274, 1
        %s1619 = scalar_lea.sflag [#allocation4], %s1618
        %s1620 = sand.u32 %s274, 1
        %s1621 = smul.addr %s1620, 128
        %s1622 = scalar_lea.vmem [#allocation10], %s1621
        // Predicated region
        $region81: #{tpu_custom_call.1} parent=63 // pred_check
          %p1623 = pneg %p284
        $region82: #{tpu_custom_call.1} parent=63 // pred_check_branch
          %1625 = sbr.rel (%p1623) target = $region84
        $region83: #{tpu_custom_call.1} parent=63 // pred_region
          %s1626 = smul.u32 16, %s30
          %s1628 = ssub.s32 2048, 2048
          %1629 = vsyncadd %s1619, %s1628
          %s1630 = smul.addr %s1626, 128
          %s1631 = scalar_lea.hbm %s11, %s1630
          %s1632 = sshll.u32 %s1622, 4
          %s1633 = int_to_ptr.vmem [resolvable:$true] %s1632
          %1638 = dma.vmem_to_hbm [thread:$0]  %s1633, 2048, %s1631, %s1619, 128, 128, 8
        $region84: #{tpu_custom_call.1} parent=63 // pred_fallthru
          _
      $region64: #{tpu_custom_call.1} parent=5 // pred_fallthru
        _
      %p1639 = scmp.le.s32.totalorder 2, %s25
      // Predicated region
      $region85: #{tpu_custom_call.1} parent=5 // pred_check
        %p1640 = pneg %p1639
      $region86: #{tpu_custom_call.1} parent=5 // pred_check_branch
        %1642 = sbr.rel (%p1640) target = $region88
      $region87: #{tpu_custom_call.1} parent=5 // pred_region
        %s1643 = ssub.s32 %s25, 2
        // Predicated region
        $region89: #{tpu_custom_call.1} parent=87 // pred_check
          %p1644 = pneg %p290
        $region90: #{tpu_custom_call.1} parent=87 // pred_check_branch
          %1646 = sbr.rel (%p1644) target = $region92
        $region91: #{tpu_custom_call.1} parent=87 // pred_region
          %s1647 = sand.u32 %s275, 1
          %s1648 = scalar_lea.sflag [#allocation4], %s1647
          %s1649 = sand.u32 %s275, 1
          %s1650 = smul.addr %s1649, 128
          %s1651 = scalar_lea.vmem [#allocation10], %s1650
          %1652 = dma.done %s1648, 2048
        $region92: #{tpu_custom_call.1} parent=87 // pred_fallthru
          _
      $region88: #{tpu_custom_call.1} parent=5 // pred_fallthru
        _
    $region6: #{tpu_custom_call.1} parent=1 // loop_footer
      %s29 = sadd.s32 1, %s25
    $region7: #{tpu_custom_call.1} parent=1 // loop_footer_branch
      %24 = sbr.rel target = $region3
    $region8: #{tpu_custom_call.1} parent=1 // loop_exit
      _
    %1653 = vsyncpa [#allocation3], 1
    %s1654 = scalar_lea.sflag [#allocation3], 1
    %1655 = vsyncpa %s1654, 1
    %1656 = vsyncpa [#allocation6], 1
    %1657 = vsyncpa [#allocation9], 1
    %1658 = vsyncpa [#allocation4], 1
    %s1659 = scalar_lea.sflag [#allocation4], 1
    %1660 = vsyncpa %s1659, 1

</llo_original>
